<compile_context>
chip_gen: v7x
topology: tpu7x:2x2x1
jax: 0.10.0
libtpu: 0.0.40
codegen_flags: <defaults>
</compile_context>

<pallas_src>
import numpy as np

import jax
import jax.numpy as jnp
from jax.experimental import pallas as pl
from jax.experimental.pallas import tpu as pltpu

LEAKY_SLOPE = 0.01  # PyTorch nn.LeakyReLU default


def _leaky(x):
    return jnp.where(x > 0, x, LEAKY_SLOPE * x)


# ---------------------------------------------------------------------------
# The single fused kernel
# ---------------------------------------------------------------------------
def _tsception_fused_kernel(x_ref, m_ref, bt_ref, p_ref, g_ref,
                            bs_ref, pp_ref, w1_ref, b1_ref, w2_ref, b2_ref,
                            o_ref, ct_ref):
    f32 = jnp.float32

    # --- Tception1/2/3: Conv2d(1, num_T, (1,k)) + LeakyReLU + AvgPool(1,8), fused -----
    # x: (C*B, T) channel-major rows; M: (T, num_T*sum(t_out)); P: (.., num_T*Tt)
    conv_pre = jnp.dot(x_ref[...], m_ref[...], preferred_element_type=f32)
    act_t = _leaky(conv_pre + bt_ref[...])
    ct_ref[...] = jnp.dot(act_t, p_ref[...], preferred_element_type=f32)   # (C*B, K)

    # --- BN_t (folded) + Sception1 + Sception2 + concat(dim=2), as a sum over EEG ch c
    # Rows of ct_ref for channel c are the contiguous slab [c*B, c*B + B).
    # g[c]: (num_T*Tt, num_S*H*Tt)
    C = g_ref.shape[0]
    B = o_ref.shape[0]
    SHT = g_ref.shape[2]
    acc = jnp.zeros((B, SHT), f32)
    for c in range(C):                              # static unroll; C (EEG chans) is tiny
        acc = acc + jnp.dot(ct_ref[pl.ds(c * B, B), :], g_ref[c],
                            preferred_element_type=f32)
    s_act = _leaky(acc + bs_ref[...])

    # --- AvgPool(1,2) + flatten; columns come out already in (s, h, w) PyTorch order ---
    flat = jnp.dot(s_act, pp_ref[...], preferred_element_type=f32)          # (B, D_in)

    # --- BN_s folded into fc1; Dropout = identity (eval); Linear -> ReLU -> Linear -----
    hid = jnp.maximum(
        jnp.dot(flat, w1_ref[...], preferred_element_type=f32) + b1_ref[...], 0.0)
    o_ref[...] = jnp.dot(hid, w2_ref[...], preferred_element_type=f32) + b2_ref[...]


def tsception_forward(x, fused):
    """x: (B, 1, C, T) NCHW float input; fused: dict from build_fused()."""
    B, _, C, T = x.shape
    # Channel-major (c, b) row order so each EEG channel is a contiguous sublane slab.
    x_cb = jnp.transpose(x[:, 0].astype(jnp.float32), (1, 0, 2)).reshape(C * B, T)
    K = fused['P'].shape[1]                       # num_T * Tt
    num_classes = fused['fc2_w'].shape[1]
    vmem = pl.BlockSpec(memory_space=pltpu.MemorySpace.VMEM)
    args = (x_cb, fused['M'], fused['bias_t'], fused['P'], fused['G'],
            fused['bias_s'], fused['Ppool2'],
            fused['fc1_w'], fused['fc1_b'], fused['fc2_w'], fused['fc2_b'])
    return pl.pallas_call(
        _tsception_fused_kernel,
        out_shape=jax.ShapeDtypeStruct((B, num_classes), jnp.float32),
        in_specs=[vmem] * len(args),
        out_specs=vmem,
        scratch_shapes=[pltpu.VMEM((C * B, K), jnp.float32)],
    )(*args)


# ---------------------------------------------------------------------------
# Host-side preparation: build the constant matmul operands once, fold BN.
# ---------------------------------------------------------------------------
def build_fused(p, *, C, T, pool=8, eps=1e-5):
    ws_t = [np.asarray(p['t1_w']), np.asarray(p['t2_w']), np.asarray(p['t3_w'])]
    bs_t = [np.asarray(p['t1_b']), np.asarray(p['t2_b']), np.asarray(p['t3_b'])]
    num_T = ws_t[0].shape[0]
    t_outs = [T - w.shape[1] + 1 for w in ws_t]
    t_pools = [to // pool for to in t_outs]
    Tt = int(sum(t_pools))
    Wconv = num_T * int(sum(t_outs))

    # Temporal conv as band matrix (cross-correlation, like PyTorch Conv2d) + bias row,
    # and an averaging/scatter matrix implementing LeakyReLU->AvgPool(1,8)->cat(dim=-1).
    M = np.zeros((T, Wconv), np.float32)
    bias_t = np.zeros((1, Wconv), np.float32)
    P = np.zeros((Wconv, num_T * Tt), np.float32)
    col0, t_off = 0, 0
    for w, b, t_out, t_pl in zip(ws_t, bs_t, t_outs, t_pools):
        k = w.shape[1]
        for o in range(num_T):
            for t in range(t_out):
                cidx = col0 + o * t_out + t
                M[t:t + k, cidx] = w[o]
                bias_t[0, cidx] = b[o]
                if t < t_pl * pool:                      # AvgPool floor/truncation
                    P[cidx, o * Tt + t_off + t // pool] = 1.0 / pool
        col0 += num_T * t_out
        t_off += t_pl

    # ---- fold eval-mode BN_t into the Sception weights/biases ----------------------
    sc_t = np.asarray(p['bn_t_gamma']) / np.sqrt(np.asarray(p['bn_t_var']) + eps)
    sh_t = np.asarray(p['bn_t_beta']) - np.asarray(p['bn_t_mean']) * sc_t
    w1 = np.asarray(p['s1_w'])
    b1 = np.asarray(p['s1_b'])
    w2 = np.asarray(p['s2_w'])
    b2 = np.asarray(p['s2_b'])
    num_S, half = w1.shape[0], w2.shape[2]
    n_rows = (C - half) // half + 1
    H = 1 + n_rows
    w1f = w1 * sc_t[None, :, None]
    b1f = b1 + (w1 * sh_t[None, :, None]).sum(axis=(1, 2))
    w2f = w2 * sc_t[None, :, None]
    b2f = b2 + (w2 * sh_t[None, :, None]).sum(axis=(1, 2))

    # Per-EEG-channel Sception matrices: rows (o, t) -> cols (s, h, t') with t == t'.
    SHT = num_S * H * Tt
    eyeT = np.eye(Tt, dtype=np.float32)
    G = np.zeros((C, num_T * Tt, SHT), np.float32)
    bias_s = np.zeros((1, SHT), np.float32)
    for s in range(num_S):
        bias_s[0, (s * H) * Tt:(s * H + 1) * Tt] = b1f[s]
        for h in range(1, H):
            bias_s[0, (s * H + h) * Tt:(s * H + h + 1) * Tt] = b2f[s]
    for c in range(C):
        for s in range(num_S):
            for o in range(num_T):
                # Sception1: Conv2d(num_T, num_S, (C,1)) -> h = 0
                G[c, o * Tt:(o + 1) * Tt, (s * H) * Tt:(s * H + 1) * Tt] += \
                    w1f[s, o, c] * eyeT
                # Sception2: Conv2d(num_T, num_S, (C//2,1), stride (C//2,1)) -> h = 1..
                h = c // half
                if h < n_rows:
                    G[c, o * Tt:(o + 1) * Tt,
                      (s * H + 1 + h) * Tt:(s * H + 2 + h) * Tt] += \
                        w2f[s, o, c % half] * eyeT

    # ---- LeakyReLU->AvgPool(1, pool//4)->flatten in (s, h, w) order -----------------
    pool_s = int(pool * 0.25)
    Ws = Tt // pool_s
    D_in = num_S * H * Ws
    Ppool2 = np.zeros((SHT, D_in), np.float32)
    for r in range(num_S * H):
        for w_ in range(Ws):
            for q in range(pool_s):
                Ppool2[r * Tt + w_ * pool_s + q, r * Ws + w_] = 1.0 / pool_s

    # ---- fold eval-mode BN_s into fc1 -----------------------------------------------
    sc_s = np.asarray(p['bn_s_gamma']) / np.sqrt(np.asarray(p['bn_s_var']) + eps)
    sh_s = np.asarray(p['bn_s_beta']) - np.asarray(p['bn_s_mean']) * sc_s
    rowscale = np.repeat(sc_s, H * Ws)
    rowshift = np.repeat(sh_s, H * Ws)
    fc1_w = np.asarray(p['fc1_w'])
    fc1_b = np.asarray(p['fc1_b'])
    fc1_wf = fc1_w * rowscale[:, None]
    fc1_bf = fc1_b + rowshift @ fc1_w

    j = jnp.asarray
    return dict(M=j(M), bias_t=j(bias_t), P=j(P), G=j(G),
                bias_s=j(bias_s), Ppool2=j(Ppool2),
                fc1_w=j(fc1_wf), fc1_b=j(fc1_bf.reshape(1, -1)),
                fc2_w=j(np.asarray(p['fc2_w'])),
                fc2_b=j(np.asarray(p['fc2_b']).reshape(1, -1)))


# ---------------------------------------------------------------------------
# Deterministic synthetic parameters (shapes from TSceptionIJCNN.__init__)
# ---------------------------------------------------------------------------
def init_params(key, *, C, T, sampling_rate, num_T, num_S, hidden, num_classes,
                pool=8):
    ks = [int(0.5 * sampling_rate), int(0.25 * sampling_rate),
          int(0.125 * sampling_rate)]
    t_pools = [(T - k + 1) // pool for k in ks]
    Tt = sum(t_pools)
    half = C // 2
    n_rows = (C - half) // half + 1
    H = 1 + n_rows
    Ws = Tt // int(pool * 0.25)
    D_in = num_S * H * Ws                     # == TSceptionIJCNN.get_size(...)[1]

    keys = jax.random.split(key, 22)

    def nrm(k_, shape, scale=0.1):
        return (scale * jax.random.normal(k_, shape)).astype(jnp.float32)

    p = {
        't1_w': nrm(keys[0], (num_T, ks[0])), 't1_b': nrm(keys[1], (num_T,)),
        't2_w': nrm(keys[2], (num_T, ks[1])), 't2_b': nrm(keys[3], (num_T,)),
        't3_w': nrm(keys[4], (num_T, ks[2])), 't3_b': nrm(keys[5], (num_T,)),
        's1_w': nrm(keys[6], (num_S, num_T, C)), 's1_b': nrm(keys[7], (num_S,)),
        's2_w': nrm(keys[8], (num_S, num_T, half)), 's2_b': nrm(keys[9], (num_S,)),
        'fc1_w': nrm(keys[10], (D_in, hidden)), 'fc1_b': nrm(keys[11], (hidden,)),
        'fc2_w': nrm(keys[12], (hidden, num_classes)),
        'fc2_b': nrm(keys[13], (num_classes,)),
    }
    i = 14
    for name, ch in (('bn_t', num_T), ('bn_s', num_S)):
        p[name + '_gamma'] = (1.0 + nrm(keys[i], (ch,))).astype(jnp.float32)
        p[name + '_beta'] = nrm(keys[i + 1], (ch,))
        p[name + '_mean'] = nrm(keys[i + 2], (ch,))
        p[name + '_var'] = (1.0 + jnp.abs(nrm(keys[i + 3], (ch,)))).astype(jnp.float32)
        i += 4
    return p


# ---------------------------------------------------------------------------
# Pure-JAX reference (independent formulation of the PyTorch forward, eval mode)
# ---------------------------------------------------------------------------
def ref_forward(x, p, eps=1e-5):
    B, _, C, T = x.shape
    pool = 8
    x2 = x[:, 0].astype(jnp.float32)

    def leaky(z):
        return jnp.where(z > 0, z, LEAKY_SLOPE * z)

    def avgpool_last(z, pp):
        n = z.shape[-1] // pp
        return z[..., :n * pp].reshape(z.shape[:-1] + (n, pp)).mean(-1)

    def tcep(w, b):
        k = w.shape[1]
        t_out = T - k + 1
        win = jnp.stack([x2[:, :, j:j + t_out] for j in range(k)], axis=-1)
        y = jnp.einsum('bctk,ok->boct', win, w) + b[None, :, None, None]
        return avgpool_last(leaky(y), pool)

    out = jnp.concatenate([tcep(p['t1_w'], p['t1_b']),
                           tcep(p['t2_w'], p['t2_b']),
                           tcep(p['t3_w'], p['t3_b'])], axis=-1)

    def bn(z, pref):
        sc = p[pref + '_gamma'] / jnp.sqrt(p[pref + '_var'] + eps)
        sh = p[pref + '_beta'] - p[pref + '_mean'] * sc
        shp = (1, -1, 1, 1)
        return z * sc.reshape(shp) + sh.reshape(shp)

    out = bn(out, 'bn_t')

    z1 = jnp.einsum('boct,soc->bst', out, p['s1_w']) + p['s1_b'][None, :, None]
    zs = [avgpool_last(leaky(z1), 2)[:, :, None, :]]
    half = p['s2_w'].shape[2]
    n_rows = (C - half) // half + 1
    for h in range(n_rows):
        oh = out[:, :, h * half:h * half + half, :]
        zh = jnp.einsum('bojt,soj->bst', oh, p['s2_w']) + p['s2_b'][None, :, None]
        zs.append(avgpool_last(leaky(zh), 2)[:, :, None, :])
    out_ = bn(jnp.concatenate(zs, axis=2), 'bn_s')

    flat = out_.reshape(B, -1)
    hid = jnp.maximum(flat @ p['fc1_w'] + p['fc1_b'], 0.0)
    return hid @ p['fc2_w'] + p['fc2_b']


if __name__ == "__main__":
    # TSceptionIJCNN(num_classes=3, input_size=(1, 4, 64), sampling_rate=32,
    #                num_T=4, num_S=4, hidden=32, dropout_rate=0.5)   [eval mode]
    num_classes, hidden = 3, 32
    B, C, T = 2, 4, 64
    sampling_rate, num_T, num_S = 32, 4, 4

    key = jax.random.PRNGKey(0)
    kx, kp = jax.random.split(key)
    x = jax.random.normal(kx, (B, 1, C, T), dtype=jnp.float32)
    params = init_params(kp, C=C, T=T, sampling_rate=sampling_rate, num_T=num_T,
                         num_S=num_S, hidden=hidden, num_classes=num_classes)
    fused = build_fused(params, C=C, T=T)

    out = jax.block_until_ready(tsception_forward(x, fused))
    ref = jax.block_until_ready(ref_forward(x, params))

    assert out.shape == (B, num_classes), out.shape
    assert jnp.allclose(out, ref, rtol=1e-2, atol=1e-2), (out, ref)
    print("KERNEL_OK")
</pallas_src>

<mosaic_0001>
module attributes {stable_mosaic.version = 11 : i64} {
  func.func @_tsception_fused_kernel(%arg0: memref<8x64xf32, #tpu.memory_space<vmem>>, %arg1: memref<64x668xf32, #tpu.memory_space<vmem>>, %arg2: memref<1x668xf32, #tpu.memory_space<vmem>>, %arg3: memref<668x80xf32, #tpu.memory_space<vmem>>, %arg4: memref<4x80x240xf32, #tpu.memory_space<vmem>>, %arg5: memref<1x240xf32, #tpu.memory_space<vmem>>, %arg6: memref<240x120xf32, #tpu.memory_space<vmem>>, %arg7: memref<120x32xf32, #tpu.memory_space<vmem>>, %arg8: memref<1x32xf32, #tpu.memory_space<vmem>>, %arg9: memref<32x3xf32, #tpu.memory_space<vmem>>, %arg10: memref<1x3xf32, #tpu.memory_space<vmem>>, %arg11: memref<2x3xf32, #tpu.memory_space<vmem>>, %arg12: memref<8x80xf32, #tpu.memory_space<vmem>>) attributes {dimension_semantics = [], scalar_prefetch = 0 : i64, scratch_operands = 1 : i64, tpu.core_type = #tpu.core_type<tc>} {
    %c0 = arith.constant 0 : index
    %c0_0 = arith.constant 0 : index
    %0 = vector.load %arg0[%c0, %c0_0] : memref<8x64xf32, #tpu.memory_space<vmem>>, vector<8x64xf32>
    %c0_1 = arith.constant 0 : index
    %c0_2 = arith.constant 0 : index
    %1 = vector.load %arg1[%c0_1, %c0_2] : memref<64x668xf32, #tpu.memory_space<vmem>>, vector<64x668xf32>
    %cst = arith.constant dense<0.000000e+00> : vector<8x668xf32>
    %2 = tpu.matmul %0, %1, %cst {dimension_numbers = #tpu.dot_dimension_numbers<[1], [0], [0], [1], [0, 0, 1, 1], [], []>} : vector<8x64xf32>, vector<64x668xf32>, vector<8x668xf32> -> vector<8x668xf32>
    %c0_3 = arith.constant 0 : index
    %c0_4 = arith.constant 0 : index
    %3 = vector.load %arg2[%c0_3, %c0_4] : memref<1x668xf32, #tpu.memory_space<vmem>>, vector<1x668xf32>
    %4 = vector.broadcast %3 : vector<1x668xf32> to vector<8x668xf32>
    %5 = arith.addf %2, %4 : vector<8x668xf32>
    %cst_5 = arith.constant 0.000000e+00 : f32
    %6 = vector.broadcast %cst_5 : f32 to vector<8x668xf32>
    %7 = arith.cmpf ogt, %5, %6 : vector<8x668xf32>
    %cst_6 = arith.constant 0.00999999977 : f32
    %8 = vector.broadcast %cst_6 : f32 to vector<8x668xf32>
    %9 = arith.mulf %8, %5 : vector<8x668xf32>
    %10 = arith.select %7, %5, %9 : vector<8x668xi1>, vector<8x668xf32>
    %c0_7 = arith.constant 0 : index
    %c0_8 = arith.constant 0 : index
    %11 = vector.load %arg3[%c0_7, %c0_8] : memref<668x80xf32, #tpu.memory_space<vmem>>, vector<668x80xf32>
    %cst_9 = arith.constant dense<0.000000e+00> : vector<8x80xf32>
    %12 = tpu.matmul %10, %11, %cst_9 {dimension_numbers = #tpu.dot_dimension_numbers<[1], [0], [0], [1], [0, 0, 1, 1], [], []>} : vector<8x668xf32>, vector<668x80xf32>, vector<8x80xf32> -> vector<8x80xf32>
    %c0_10 = arith.constant 0 : index
    %c0_11 = arith.constant 0 : index
    %13 = vector.load %arg12[%c0_10, %c0_11] : memref<8x80xf32, #tpu.memory_space<vmem>>, vector<8x80xf32>
    tpu.vector_store %arg12[%c0_10, %c0_11], %12 {strides = array<i32>} : memref<8x80xf32, #tpu.memory_space<vmem>>, vector<8x80xf32>,
    %cst_12 = arith.constant 0.000000e+00 : f32
    %14 = vector.broadcast %cst_12 : f32 to vector<2x240xf32>
    %c0_13 = arith.constant 0 : index
    %c0_14 = arith.constant 0 : index
    %15 = vector.load %arg12[%c0_13, %c0_14] : memref<8x80xf32, #tpu.memory_space<vmem>>, vector<2x80xf32>
    %c0_15 = arith.constant 0 : index
    %c0_16 = arith.constant 0 : index
    %c0_17 = arith.constant 0 : index
    %16 = vector.load %arg4[%c0_15, %c0_16, %c0_17] : memref<4x80x240xf32, #tpu.memory_space<vmem>>, vector<1x80x240xf32>
    %17 = vector.shape_cast %16 : vector<1x80x240xf32> to vector<80x240xf32>
    %cst_18 = arith.constant dense<0.000000e+00> : vector<2x240xf32>
    %18 = tpu.matmul %15, %17, %cst_18 {dimension_numbers = #tpu.dot_dimension_numbers<[1], [0], [0], [1], [0, 0, 1, 1], [], []>} : vector<2x80xf32>, vector<80x240xf32>, vector<2x240xf32> -> vector<2x240xf32>
    %19 = arith.addf %14, %18 : vector<2x240xf32>
    %c2 = arith.constant 2 : index
    %c0_19 = arith.constant 0 : index
    %20 = vector.load %arg12[%c2, %c0_19] : memref<8x80xf32, #tpu.memory_space<vmem>>, vector<2x80xf32>
    %c1 = arith.constant 1 : index
    %c0_20 = arith.constant 0 : index
    %c0_21 = arith.constant 0 : index
    %21 = vector.load %arg4[%c1, %c0_20, %c0_21] : memref<4x80x240xf32, #tpu.memory_space<vmem>>, vector<1x80x240xf32>
    %22 = vector.shape_cast %21 : vector<1x80x240xf32> to vector<80x240xf32>
    %cst_22 = arith.constant dense<0.000000e+00> : vector<2x240xf32>
    %23 = tpu.matmul %20, %22, %cst_22 {dimension_numbers = #tpu.dot_dimension_numbers<[1], [0], [0], [1], [0, 0, 1, 1], [], []>} : vector<2x80xf32>, vector<80x240xf32>, vector<2x240xf32> -> vector<2x240xf32>
    %24 = arith.addf %19, %23 : vector<2x240xf32>
    %c4 = arith.constant 4 : index
    %c0_23 = arith.constant 0 : index
    %25 = vector.load %arg12[%c4, %c0_23] : memref<8x80xf32, #tpu.memory_space<vmem>>, vector<2x80xf32>
    %c2_24 = arith.constant 2 : index
    %c0_25 = arith.constant 0 : index
    %c0_26 = arith.constant 0 : index
    %26 = vector.load %arg4[%c2_24, %c0_25, %c0_26] : memref<4x80x240xf32, #tpu.memory_space<vmem>>, vector<1x80x240xf32>
    %27 = vector.shape_cast %26 : vector<1x80x240xf32> to vector<80x240xf32>
    %cst_27 = arith.constant dense<0.000000e+00> : vector<2x240xf32>
    %28 = tpu.matmul %25, %27, %cst_27 {dimension_numbers = #tpu.dot_dimension_numbers<[1], [0], [0], [1], [0, 0, 1, 1], [], []>} : vector<2x80xf32>, vector<80x240xf32>, vector<2x240xf32> -> vector<2x240xf32>
    %29 = arith.addf %24, %28 : vector<2x240xf32>
    %c6 = arith.constant 6 : index
    %c0_28 = arith.constant 0 : index
    %30 = vector.load %arg12[%c6, %c0_28] : memref<8x80xf32, #tpu.memory_space<vmem>>, vector<2x80xf32>
    %c3 = arith.constant 3 : index
    %c0_29 = arith.constant 0 : index
    %c0_30 = arith.constant 0 : index
    %31 = vector.load %arg4[%c3, %c0_29, %c0_30] : memref<4x80x240xf32, #tpu.memory_space<vmem>>, vector<1x80x240xf32>
    %32 = vector.shape_cast %31 : vector<1x80x240xf32> to vector<80x240xf32>
    %cst_31 = arith.constant dense<0.000000e+00> : vector<2x240xf32>
    %33 = tpu.matmul %30, %32, %cst_31 {dimension_numbers = #tpu.dot_dimension_numbers<[1], [0], [0], [1], [0, 0, 1, 1], [], []>} : vector<2x80xf32>, vector<80x240xf32>, vector<2x240xf32> -> vector<2x240xf32>
    %34 = arith.addf %29, %33 : vector<2x240xf32>
    %c0_32 = arith.constant 0 : index
    %c0_33 = arith.constant 0 : index
    %35 = vector.load %arg5[%c0_32, %c0_33] : memref<1x240xf32, #tpu.memory_space<vmem>>, vector<1x240xf32>
    %36 = vector.broadcast %35 : vector<1x240xf32> to vector<2x240xf32>
    %37 = arith.addf %34, %36 : vector<2x240xf32>
    %cst_34 = arith.constant 0.000000e+00 : f32
    %38 = vector.broadcast %cst_34 : f32 to vector<2x240xf32>
    %39 = arith.cmpf ogt, %37, %38 : vector<2x240xf32>
    %cst_35 = arith.constant 0.00999999977 : f32
    %40 = vector.broadcast %cst_35 : f32 to vector<2x240xf32>
    %41 = arith.mulf %40, %37 : vector<2x240xf32>
    %42 = arith.select %39, %37, %41 : vector<2x240xi1>, vector<2x240xf32>
    %c0_36 = arith.constant 0 : index
    %c0_37 = arith.constant 0 : index
    %43 = vector.load %arg6[%c0_36, %c0_37] : memref<240x120xf32, #tpu.memory_space<vmem>>, vector<240x120xf32>
    %cst_38 = arith.constant dense<0.000000e+00> : vector<2x120xf32>
    %44 = tpu.matmul %42, %43, %cst_38 {dimension_numbers = #tpu.dot_dimension_numbers<[1], [0], [0], [1], [0, 0, 1, 1], [], []>} : vector<2x240xf32>, vector<240x120xf32>, vector<2x120xf32> -> vector<2x120xf32>
    %c0_39 = arith.constant 0 : index
    %c0_40 = arith.constant 0 : index
    %45 = vector.load %arg7[%c0_39, %c0_40] : memref<120x32xf32, #tpu.memory_space<vmem>>, vector<120x32xf32>
    %cst_41 = arith.constant dense<0.000000e+00> : vector<2x32xf32>
    %46 = tpu.matmul %44, %45, %cst_41 {dimension_numbers = #tpu.dot_dimension_numbers<[1], [0], [0], [1], [0, 0, 1, 1], [], []>} : vector<2x120xf32>, vector<120x32xf32>, vector<2x32xf32> -> vector<2x32xf32>
    %c0_42 = arith.constant 0 : index
    %c0_43 = arith.constant 0 : index
    %47 = vector.load %arg8[%c0_42, %c0_43] : memref<1x32xf32, #tpu.memory_space<vmem>>, vector<1x32xf32>
    %48 = vector.broadcast %47 : vector<1x32xf32> to vector<2x32xf32>
    %49 = arith.addf %46, %48 : vector<2x32xf32>
    %cst_44 = arith.constant 0.000000e+00 : f32
    %50 = vector.broadcast %cst_44 : f32 to vector<2x32xf32>
    %51 = arith.maximumf %49, %50 : vector<2x32xf32>
    %c0_45 = arith.constant 0 : index
    %c0_46 = arith.constant 0 : index
    %52 = vector.load %arg9[%c0_45, %c0_46] : memref<32x3xf32, #tpu.memory_space<vmem>>, vector<32x3xf32>
    %cst_47 = arith.constant dense<0.000000e+00> : vector<2x3xf32>
    %53 = tpu.matmul %51, %52, %cst_47 {dimension_numbers = #tpu.dot_dimension_numbers<[1], [0], [0], [1], [0, 0, 1, 1], [], []>} : vector<2x32xf32>, vector<32x3xf32>, vector<2x3xf32> -> vector<2x3xf32>
    %c0_48 = arith.constant 0 : index
    %c0_49 = arith.constant 0 : index
    %54 = vector.load %arg10[%c0_48, %c0_49] : memref<1x3xf32, #tpu.memory_space<vmem>>, vector<1x3xf32>
    %55 = vector.broadcast %54 : vector<1x3xf32> to vector<2x3xf32>
    %56 = arith.addf %53, %55 : vector<2x3xf32>
    %c0_50 = arith.constant 0 : index
    %c0_51 = arith.constant 0 : index
    %57 = vector.load %arg11[%c0_50, %c0_51] : memref<2x3xf32, #tpu.memory_space<vmem>>, vector<2x3xf32>
    tpu.vector_store %arg11[%c0_50, %c0_51], %56 {strides = array<i32>} : memref<2x3xf32, #tpu.memory_space<vmem>>, vector<2x3xf32>,
    return
  }
}

</mosaic_0001>

<llo_original>
// kernel: tpu_custom_call.1
$region0: #{tpu_custom_call.1}
  #allocation0 [shape = 'u32[]', space=smem, size = 0x4, offset = 0x4, fixed_abs, tag = 'smem constant byte address 0x4 - core index']
  #allocation1 [shape = 'u32[144,128]{1,0:T(1,128)}', space=vmem, size = 0x12000, scoped, tag = 'internal scratch']
  #allocation2 [shape = 'f32[8,80]{1,0:T(8,128)}', space=vmem, size = 0x1000, scoped, tag = 'scratch operand']
  %s0 = inlined_call_operand.vmem [shape: f32[8,64], index: 0, kind: input, shape index: {}]
  %s1 = inlined_call_operand.vmem [shape: f32[64,668], index: 1, kind: input, shape index: {}]
  %s2 = inlined_call_operand.vmem [shape: f32[1,668], index: 2, kind: input, shape index: {}]
  %s3 = inlined_call_operand.vmem [shape: f32[668,80], index: 3, kind: input, shape index: {}]
  %s4 = inlined_call_operand.vmem [shape: f32[4,80,240], index: 4, kind: input, shape index: {}]
  %s5 = inlined_call_operand.vmem [shape: f32[1,240], index: 5, kind: input, shape index: {}]
  %s6 = inlined_call_operand.vmem [shape: f32[240,120], index: 6, kind: input, shape index: {}]
  %s7 = inlined_call_operand.vmem [shape: f32[120,32], index: 7, kind: input, shape index: {}]
  %s8 = inlined_call_operand.vmem [shape: f32[1,32], index: 8, kind: input, shape index: {}]
  %s9 = inlined_call_operand.vmem [shape: f32[32,3], index: 9, kind: input, shape index: {}]
  %s10 = inlined_call_operand.vmem [shape: f32[1,3], index: 10, kind: input, shape index: {}]
  %s11 = inlined_call_operand.hbm [shape: f32[2,3], index: 11, kind: output, shape index: {}]
  %s12 = sld [smem:[#allocation0]]
  $region54: #{tpu_custom_call.1} parent=0
    _
  %s14 = ssub.s32 1, %s12
  %s15 = scalar_select 0, %s14, %s12
  $region1: #{tpu_custom_call.1} parent=0
    #allocation3 [shape = 'u8[1024]{0}', space=vmem, size = 0x400, scoped, tag = 'output window, operand 0, single buffered']
    #allocation4 [shape = 's32[1]{0}', space=sflag, size = 0x4, scoped, tag = 'scoped memory for tpu_custom_call.1']
    %16 = vsyncpa [#allocation4], 0
    // Predicated region
    $region2: #{tpu_custom_call.1} parent=1 // pred_check
      _
    $region3: #{tpu_custom_call.1} parent=1 // pred_check_branch
      %18 = sbr.rel (0) target = $region5
    $region4: #{tpu_custom_call.1} parent=1 // pred_region
      _
    $region5: #{tpu_custom_call.1} parent=1 // pred_fallthru
      _
    // Predicated region
    $region6: #{tpu_custom_call.1} parent=1 // pred_check
      _
    $region7: #{tpu_custom_call.1} parent=1 // pred_check_branch
      %20 = sbr.rel (0) target = $region9
    $region8: #{tpu_custom_call.1} parent=1 // pred_region
      _
    $region9: #{tpu_custom_call.1} parent=1 // pred_fallthru
      _
    // Predicated region
    $region10: #{tpu_custom_call.1} parent=1 // pred_check
      _
    $region11: #{tpu_custom_call.1} parent=1 // pred_check_branch
      %22 = sbr.rel (0) target = $region13
    $region12: #{tpu_custom_call.1} parent=1 // pred_region
      _
    $region13: #{tpu_custom_call.1} parent=1 // pred_fallthru
      _
    // Predicated region
    $region14: #{tpu_custom_call.1} parent=1 // pred_check
      _
    $region15: #{tpu_custom_call.1} parent=1 // pred_check_branch
      %24 = sbr.rel (0) target = $region17
    $region16: #{tpu_custom_call.1} parent=1 // pred_region
      _
    $region17: #{tpu_custom_call.1} parent=1 // pred_fallthru
      _
    // Predicated region
    $region18: #{tpu_custom_call.1} parent=1 // pred_check
      _
    $region19: #{tpu_custom_call.1} parent=1 // pred_check_branch
      %26 = sbr.rel (0) target = $region21
    $region20: #{tpu_custom_call.1} parent=1 // pred_region
      _
    $region21: #{tpu_custom_call.1} parent=1 // pred_fallthru
      _
    // Predicated region
    $region22: #{tpu_custom_call.1} parent=1 // pred_check
      _
    $region23: #{tpu_custom_call.1} parent=1 // pred_check_branch
      %28 = sbr.rel (0) target = $region25
    $region24: #{tpu_custom_call.1} parent=1 // pred_region
      _
    $region25: #{tpu_custom_call.1} parent=1 // pred_fallthru
      _
    // Predicated region
    $region26: #{tpu_custom_call.1} parent=1 // pred_check
      _
    $region27: #{tpu_custom_call.1} parent=1 // pred_check_branch
      %30 = sbr.rel (0) target = $region29
    $region28: #{tpu_custom_call.1} parent=1 // pred_region
      _
    $region29: #{tpu_custom_call.1} parent=1 // pred_fallthru
      _
    // Predicated region
    $region30: #{tpu_custom_call.1} parent=1 // pred_check
      _
    $region31: #{tpu_custom_call.1} parent=1 // pred_check_branch
      %32 = sbr.rel (0) target = $region33
    $region32: #{tpu_custom_call.1} parent=1 // pred_region
      _
    $region33: #{tpu_custom_call.1} parent=1 // pred_fallthru
      _
    // Predicated region
    $region34: #{tpu_custom_call.1} parent=1 // pred_check
      _
    $region35: #{tpu_custom_call.1} parent=1 // pred_check_branch
      %34 = sbr.rel (0) target = $region37
    $region36: #{tpu_custom_call.1} parent=1 // pred_region
      _
    $region37: #{tpu_custom_call.1} parent=1 // pred_fallthru
      _
    // Predicated region
    $region38: #{tpu_custom_call.1} parent=1 // pred_check
      _
    $region39: #{tpu_custom_call.1} parent=1 // pred_check_branch
      %36 = sbr.rel (0) target = $region41
    $region40: #{tpu_custom_call.1} parent=1 // pred_region
      _
    $region41: #{tpu_custom_call.1} parent=1 // pred_fallthru
      _
    // Predicated region
    $region42: #{tpu_custom_call.1} parent=1 // pred_check
      _
    $region43: #{tpu_custom_call.1} parent=1 // pred_check_branch
      %38 = sbr.rel (0) target = $region45
    $region44: #{tpu_custom_call.1} parent=1 // pred_region
      _
    $region45: #{tpu_custom_call.1} parent=1 // pred_fallthru
      _
    %v39 = vld [vmem:[%s0] sm:$0xff]
    %v40 = vld [vmem:[%s1] sm:$0xff]
    %v41 = vld [vmem:[%s1 + $0x8] sm:$0xff]
    %v42 = vld [vmem:[%s1 + $0x10] sm:$0xff]
    %v43 = vld [vmem:[%s1 + $0x18] sm:$0xff]
    %v44 = vld [vmem:[%s1 + $0x20] sm:$0xff]
    %v45 = vld [vmem:[%s1 + $0x28] sm:$0xff]
    %v46 = vld [vmem:[%s1 + $0x30] sm:$0xff]
    %v47 = vld [vmem:[%s1 + $0x38] sm:$0xff]
    %v48 = vld [vmem:[%s1 + $0x40] sm:$0xff]
    %v49 = vld [vmem:[%s1 + $0x48] sm:$0xff]
    %v50 = vld [vmem:[%s1 + $0x50] sm:$0xff]
    %v51 = vld [vmem:[%s1 + $0x58] sm:$0xff]
    %v52 = vld [vmem:[%s1 + $0x60] sm:$0xff]
    %v53 = vld [vmem:[%s1 + $0x68] sm:$0xff]
    %v54 = vld [vmem:[%s1 + $0x70] sm:$0xff]
    %v55 = vld [vmem:[%s1 + $0x78] sm:$0xff]
    %v56 = vld [vmem:[%s1 + $0x80] sm:$0xff]
    %v57 = vld [vmem:[%s1 + $0x88] sm:$0xff]
    %v58 = vld [vmem:[%s1 + $0x90] sm:$0xff]
    %v59 = vld [vmem:[%s1 + $0x98] sm:$0xff]
    %v60 = vld [vmem:[%s1 + $0xa0] sm:$0xff]
    %v61 = vld [vmem:[%s1 + $0xa8] sm:$0xff]
    %v62 = vld [vmem:[%s1 + $0xb0] sm:$0xff]
    %v63 = vld [vmem:[%s1 + $0xb8] sm:$0xff]
    %v64 = vld [vmem:[%s1 + $0xc0] sm:$0xff]
    %v65 = vld [vmem:[%s1 + $0xc8] sm:$0xff]
    %v66 = vld [vmem:[%s1 + $0xd0] sm:$0xff]
    %v67 = vld [vmem:[%s1 + $0xd8] sm:$0xff]
    %v68 = vld [vmem:[%s1 + $0xe0] sm:$0xff]
    %v69 = vld [vmem:[%s1 + $0xe8] sm:$0xff]
    %v70 = vld [vmem:[%s1 + $0xf0] sm:$0xff]
    %v71 = vld [vmem:[%s1 + $0xf8] sm:$0xff]
    %v72 = vld [vmem:[%s1 + $0x100] sm:$0xff]
    %v73 = vld [vmem:[%s1 + $0x108] sm:$0xff]
    %v74 = vld [vmem:[%s1 + $0x110] sm:$0xff]
    %v75 = vld [vmem:[%s1 + $0x118] sm:$0xff]
    %v76 = vld [vmem:[%s1 + $0x120] sm:$0xff]
    %v77 = vld [vmem:[%s1 + $0x128] sm:$0xff]
    %v78 = vld [vmem:[%s1 + $0x130] sm:$0xff]
    %v79 = vld [vmem:[%s1 + $0x138] sm:$0xff]
    %v80 = vld [vmem:[%s1 + $0x140] sm:$0xff]
    %v81 = vld [vmem:[%s1 + $0x148] sm:$0xff]
    %v82 = vld [vmem:[%s1 + $0x150] sm:$0xff]
    %v83 = vld [vmem:[%s1 + $0x158] sm:$0xff]
    %v84 = vld [vmem:[%s1 + $0x160] sm:$0xff]
    %v85 = vld [vmem:[%s1 + $0x168] sm:$0xff]
    %v86 = vld [vmem:[%s1 + $0x170] sm:$0xff]
    %v87 = vld [vmem:[%s1 + $0x178] sm:$0xff]
    %v88 = vld [vmem:[%s2] sm:$0x3f]
    %v90 = vlaneseq
    %v91 = vshrl.u32 %v90, 7
    %v92 = vsub.s32 0, %v91
    %v93 = vrot.slane %v88, %v92
    %v94 = vlaneseq
    %v95 = vshrl.u32 %v94, 7
    %v96 = vsub.s32 1, %v95
    %v97 = vrot.slane %v88, %v96
    %v98 = vlaneseq
    %v99 = vshrl.u32 %v98, 7
    %v100 = vsub.s32 2, %v99
    %v101 = vrot.slane %v88, %v100
    %v102 = vlaneseq
    %v103 = vshrl.u32 %v102, 7
    %v104 = vsub.s32 3, %v103
    %v105 = vrot.slane %v88, %v104
    %v106 = vlaneseq
    %v107 = vshrl.u32 %v106, 7
    %v108 = vsub.s32 4, %v107
    %v109 = vrot.slane %v88, %v108
    %v110 = vlaneseq
    %v111 = vshrl.u32 %v110, 7
    %v112 = vsub.s32 5, %v111
    %v113 = vrot.slane %v88, %v112
    %vm120 = vcmask 523264
    %v122 = vsel %vm120, %v39, 0
    %124 = vmatprep.subr.mxu0 %v41
    %125 = vmatpush1.msra.mxu0 %v40
    %126 = vmatprep.subr.mxu0 %v47
    %127 = vmatpush1.msra.mxu0 %v46
    %128 = vmatprep.subr.mxu0 %v53
    %129 = vmatpush1.msra.mxu0 %v52
    %130 = vmatprep.subr.mxu0 %v59
    %131 = vmatpush1.msra.mxu0 %v58
    %132 = vmatprep.subr.mxu0 %v65
    %133 = vmatpush1.msra.mxu0 %v64
    %134 = vmatprep.subr.mxu0 %v71
    %135 = vmatpush1.msra.mxu0 %v70
    %136 = vmatprep.subr.mxu0 %v77
    %137 = vmatpush1.msra.mxu0 %v76
    %138 = vmatprep.subr.mxu0 %v83
    %139 = vmatpush1.msra.mxu0 %v82
    %140 = vmatprep.subr.mxu0 0.0
    %141 = vmatpush1.msra.mxu0 0.0
    %142 = vmatprep.subr.mxu0 0.0
    %143 = vmatpush1.msra.mxu0 0.0
    %144 = vmatprep.subr.mxu0 0.0
    %145 = vmatpush1.msra.mxu0 0.0
    %146 = vmatprep.subr.mxu0 0.0
    %147 = vmatpush1.msra.mxu0 0.0
    %148 = vmatprep.subr.mxu0 0.0
    %149 = vmatpush1.msra.mxu0 0.0
    %150 = vmatprep.subr.mxu0 0.0
    %151 = vmatpush1.msra.mxu0 0.0
    %152 = vmatprep.subr.mxu0 0.0
    %153 = vmatpush1.msra.mxu0 0.0
    %154 = vmatprep.subr.mxu0 0.0
    %155 = vmatpush1.msra.mxu0 0.0
    %156 = vmatprep.subr.mxu0 0.0
    %157 = vmatpush1.msra.mxu0 0.0
    %158 = vmatprep.subr.mxu0 0.0
    %159 = vmatpush1.msra.mxu0 0.0
    %160 = vmatprep.subr.mxu0 0.0
    %161 = vmatpush1.msra.mxu0 0.0
    %162 = vmatprep.subr.mxu0 0.0
    %163 = vmatpush1.msra.mxu0 0.0
    %164 = vmatprep.subr.mxu0 0.0
    %165 = vmatpush1.msra.mxu0 0.0
    %166 = vmatprep.subr.mxu0 0.0
    %167 = vmatpush1.msra.mxu0 0.0
    %168 = vmatprep.subr.mxu0 0.0
    %169 = vmatpush1.msra.mxu0 0.0
    %170 = vmatprep.subr.mxu0 0.0
    %171 = vmatpush1.msra.mxu0 0.0
    %172 = vmatprep.subr.mxu0 0.0
    %173 = vmatpush1.msra.mxu0 0.0
    %174 = vmatprep.subr.mxu0 0.0
    %175 = vmatpush1.msra.mxu0 0.0
    %176 = vmatprep.subr.mxu0 0.0
    %177 = vmatpush1.msra.mxu0 0.0
    %178 = vmatprep.subr.mxu0 0.0
    %179 = vmatpush1.msra.mxu0 0.0
    %180 = vmatprep.subr.mxu0 0.0
    %181 = vmatpush1.msra.mxu0 0.0
    %182 = vmatprep.subr.mxu0 0.0
    %183 = vmatpush1.msra.mxu0 0.0
    %184 = vmatprep.subr.mxu0 0.0
    %185 = vmatpush1.msra.mxu0 0.0
    %186 = vmatprep.subr.mxu0 0.0
    %187 = vmatpush1.msra.mxu0 0.0
    %188 = vmatprep.mubr.f32.mxu0 0.0
    %189 = vmatmul.mubr.f32.gmra.mrb[0].mxu0 %v122
    %v190 = vpop.f32.mrb[0].mxu0
    %v191 = vadd.f32 %v93, %v190
    %v192 = vpop.f32.mrb[0].mxu0
    %v193 = vadd.f32 %v97, %v192
    %194 = vdwg.mxu0
    %195 = vmatprep.subr.mxu0 %v43
    %196 = vmatpush1.msra.mxu0 %v42
    %197 = vmatprep.subr.mxu0 %v49
    %198 = vmatpush1.msra.mxu0 %v48
    %199 = vmatprep.subr.mxu0 %v55
    %200 = vmatpush1.msra.mxu0 %v54
    %201 = vmatprep.subr.mxu0 %v61
    %202 = vmatpush1.msra.mxu0 %v60
    %203 = vmatprep.subr.mxu0 %v67
    %204 = vmatpush1.msra.mxu0 %v66
    %205 = vmatprep.subr.mxu0 %v73
    %206 = vmatpush1.msra.mxu0 %v72
    %207 = vmatprep.subr.mxu0 %v79
    %208 = vmatpush1.msra.mxu0 %v78
    %209 = vmatprep.subr.mxu0 %v85
    %210 = vmatpush1.msra.mxu0 %v84
    %211 = vmatprep.subr.mxu0 0.0
    %212 = vmatpush1.msra.mxu0 0.0
    %213 = vmatprep.subr.mxu0 0.0
    %214 = vmatpush1.msra.mxu0 0.0
    %215 = vmatprep.subr.mxu0 0.0
    %216 = vmatpush1.msra.mxu0 0.0
    %217 = vmatprep.subr.mxu0 0.0
    %218 = vmatpush1.msra.mxu0 0.0
    %219 = vmatprep.subr.mxu0 0.0
    %220 = vmatpush1.msra.mxu0 0.0
    %221 = vmatprep.subr.mxu0 0.0
    %222 = vmatpush1.msra.mxu0 0.0
    %223 = vmatprep.subr.mxu0 0.0
    %224 = vmatpush1.msra.mxu0 0.0
    %225 = vmatprep.subr.mxu0 0.0
    %226 = vmatpush1.msra.mxu0 0.0
    %227 = vmatprep.subr.mxu0 0.0
    %228 = vmatpush1.msra.mxu0 0.0
    %229 = vmatprep.subr.mxu0 0.0
    %230 = vmatpush1.msra.mxu0 0.0
    %231 = vmatprep.subr.mxu0 0.0
    %232 = vmatpush1.msra.mxu0 0.0
    %233 = vmatprep.subr.mxu0 0.0
    %234 = vmatpush1.msra.mxu0 0.0
    %235 = vmatprep.subr.mxu0 0.0
    %236 = vmatpush1.msra.mxu0 0.0
    %237 = vmatprep.subr.mxu0 0.0
    %238 = vmatpush1.msra.mxu0 0.0
    %239 = vmatprep.subr.mxu0 0.0
    %240 = vmatpush1.msra.mxu0 0.0
    %241 = vmatprep.subr.mxu0 0.0
    %242 = vmatpush1.msra.mxu0 0.0
    %243 = vmatprep.subr.mxu0 0.0
    %244 = vmatpush1.msra.mxu0 0.0
    %245 = vmatprep.subr.mxu0 0.0
    %246 = vmatpush1.msra.mxu0 0.0
    %247 = vmatprep.subr.mxu0 0.0
    %248 = vmatpush1.msra.mxu0 0.0
    %249 = vmatprep.subr.mxu0 0.0
    %250 = vmatpush1.msra.mxu0 0.0
    %251 = vmatprep.subr.mxu0 0.0
    %252 = vmatpush1.msra.mxu0 0.0
    %253 = vmatprep.subr.mxu0 0.0
    %254 = vmatpush1.msra.mxu0 0.0
    %255 = vmatprep.subr.mxu0 0.0
    %256 = vmatpush1.msra.mxu0 0.0
    %257 = vmatprep.subr.mxu0 0.0
    %258 = vmatpush1.msra.mxu0 0.0
    %259 = vmatprep.mubr.f32.mxu0 0.0
    %260 = vmatmul.mubr.f32.gmra.mrb[0].mxu0 %v122
    %v261 = vpop.f32.mrb[0].mxu0
    %v262 = vadd.f32 %v101, %v261
    %v263 = vpop.f32.mrb[0].mxu0
    %v264 = vadd.f32 %v105, %v263
    %265 = vdwg.mxu0
    %266 = vmatprep.subr.mxu0 %v45
    %267 = vmatpush1.msra.mxu0 %v44
    %268 = vmatprep.subr.mxu0 %v51
    %269 = vmatpush1.msra.mxu0 %v50
    %270 = vmatprep.subr.mxu0 %v57
    %271 = vmatpush1.msra.mxu0 %v56
    %272 = vmatprep.subr.mxu0 %v63
    %273 = vmatpush1.msra.mxu0 %v62
    %274 = vmatprep.subr.mxu0 %v69
    %275 = vmatpush1.msra.mxu0 %v68
    %276 = vmatprep.subr.mxu0 %v75
    %277 = vmatpush1.msra.mxu0 %v74
    %278 = vmatprep.subr.mxu0 %v81
    %279 = vmatpush1.msra.mxu0 %v80
    %280 = vmatprep.subr.mxu0 %v87
    %281 = vmatpush1.msra.mxu0 %v86
    %282 = vmatprep.subr.mxu0 0.0
    %283 = vmatpush1.msra.mxu0 0.0
    %284 = vmatprep.subr.mxu0 0.0
    %285 = vmatpush1.msra.mxu0 0.0
    %286 = vmatprep.subr.mxu0 0.0
    %287 = vmatpush1.msra.mxu0 0.0
    %288 = vmatprep.subr.mxu0 0.0
    %289 = vmatpush1.msra.mxu0 0.0
    %290 = vmatprep.subr.mxu0 0.0
    %291 = vmatpush1.msra.mxu0 0.0
    %292 = vmatprep.subr.mxu0 0.0
    %293 = vmatpush1.msra.mxu0 0.0
    %294 = vmatprep.subr.mxu0 0.0
    %295 = vmatpush1.msra.mxu0 0.0
    %296 = vmatprep.subr.mxu0 0.0
    %297 = vmatpush1.msra.mxu0 0.0
    %298 = vmatprep.subr.mxu0 0.0
    %299 = vmatpush1.msra.mxu0 0.0
    %300 = vmatprep.subr.mxu0 0.0
    %301 = vmatpush1.msra.mxu0 0.0
    %302 = vmatprep.subr.mxu0 0.0
    %303 = vmatpush1.msra.mxu0 0.0
    %304 = vmatprep.subr.mxu0 0.0
    %305 = vmatpush1.msra.mxu0 0.0
    %306 = vmatprep.subr.mxu0 0.0
    %307 = vmatpush1.msra.mxu0 0.0
    %308 = vmatprep.subr.mxu0 0.0
    %309 = vmatpush1.msra.mxu0 0.0
    %310 = vmatprep.subr.mxu0 0.0
    %311 = vmatpush1.msra.mxu0 0.0
    %312 = vmatprep.subr.mxu0 0.0
    %313 = vmatpush1.msra.mxu0 0.0
    %314 = vmatprep.subr.mxu0 0.0
    %315 = vmatpush1.msra.mxu0 0.0
    %316 = vmatprep.subr.mxu0 0.0
    %317 = vmatpush1.msra.mxu0 0.0
    %318 = vmatprep.subr.mxu0 0.0
    %319 = vmatpush1.msra.mxu0 0.0
    %320 = vmatprep.subr.mxu0 0.0
    %321 = vmatpush1.msra.mxu0 0.0
    %322 = vmatprep.subr.mxu0 0.0
    %323 = vmatpush1.msra.mxu0 0.0
    %324 = vmatprep.subr.mxu0 0.0
    %325 = vmatpush1.msra.mxu0 0.0
    %326 = vmatprep.subr.mxu0 0.0
    %327 = vmatpush1.msra.mxu0 0.0
    %328 = vmatprep.subr.mxu0 0.0
    %329 = vmatpush1.msra.mxu0 0.0
    %330 = vmatprep.mubr.f32.mxu0 0.0
    %331 = vmatmul.mubr.f32.gmra.mrb[0].mxu0 %v122
    %v332 = vpop.f32.mrb[0].mxu0
    %v333 = vadd.f32 %v109, %v332
    %v334 = vpop.f32.mrb[0].mxu0
    %v335 = vadd.f32 %v113, %v334
    %336 = vdwg.mxu0
    %vm337 = vcmp.gt.f32.partialorder %v191, 0.0
    %vm338 = vcmp.gt.f32.partialorder %v193, 0.0
    %vm339 = vcmp.gt.f32.partialorder %v262, 0.0
    %vm340 = vcmp.gt.f32.partialorder %v264, 0.0
    %vm341 = vcmp.gt.f32.partialorder %v333, 0.0
    %vm342 = vcmp.gt.f32.partialorder %v335, 0.0
    %v343 = vmul.f32 %v191, 0.01
    %v344 = vmul.f32 %v193, 0.01
    %v345 = vmul.f32 %v262, 0.01
    %v346 = vmul.f32 %v264, 0.01
    %v347 = vmul.f32 %v333, 0.01
    %v348 = vmul.f32 %v335, 0.01
    %v349 = vsel %vm337, %v191, %v343
    %v350 = vsel %vm338, %v193, %v344
    %v351 = vsel %vm339, %v262, %v345
    %v352 = vsel %vm340, %v264, %v346
    %v353 = vsel %vm341, %v333, %v347
    %v354 = vsel %vm342, %v335, %v348
    %v355 = vld [vmem:[%s3] sm:$0xff]
    %v356 = vld [vmem:[%s3 + $0x8] sm:$0xff]
    %v357 = vld [vmem:[%s3 + $0x10] sm:$0xff]
    %v358 = vld [vmem:[%s3 + $0x18] sm:$0xff]
    %v359 = vld [vmem:[%s3 + $0x20] sm:$0xff]
    %v360 = vld [vmem:[%s3 + $0x28] sm:$0xff]
    %v361 = vld [vmem:[%s3 + $0x30] sm:$0xff]
    %v362 = vld [vmem:[%s3 + $0x38] sm:$0xff]
    %v363 = vld [vmem:[%s3 + $0x40] sm:$0xff]
    %v364 = vld [vmem:[%s3 + $0x48] sm:$0xff]
    %v365 = vld [vmem:[%s3 + $0x50] sm:$0xff]
    %v366 = vld [vmem:[%s3 + $0x58] sm:$0xff]
    %v367 = vld [vmem:[%s3 + $0x60] sm:$0xff]
    %v368 = vld [vmem:[%s3 + $0x68] sm:$0xff]
    %v369 = vld [vmem:[%s3 + $0x70] sm:$0xff]
    %v370 = vld [vmem:[%s3 + $0x78] sm:$0xff]
    %v371 = vld [vmem:[%s3 + $0x80] sm:$0xff]
    %v372 = vld [vmem:[%s3 + $0x88] sm:$0xff]
    %v373 = vld [vmem:[%s3 + $0x90] sm:$0xff]
    %v374 = vld [vmem:[%s3 + $0x98] sm:$0xff]
    %v375 = vld [vmem:[%s3 + $0xa0] sm:$0xff]
    %v376 = vld [vmem:[%s3 + $0xa8] sm:$0xff]
    %v377 = vld [vmem:[%s3 + $0xb0] sm:$0xff]
    %v378 = vld [vmem:[%s3 + $0xb8] sm:$0xff]
    %v379 = vld [vmem:[%s3 + $0xc0] sm:$0xff]
    %v380 = vld [vmem:[%s3 + $0xc8] sm:$0xff]
    %v381 = vld [vmem:[%s3 + $0xd0] sm:$0xff]
    %v382 = vld [vmem:[%s3 + $0xd8] sm:$0xff]
    %v383 = vld [vmem:[%s3 + $0xe0] sm:$0xff]
    %v384 = vld [vmem:[%s3 + $0xe8] sm:$0xff]
    %v385 = vld [vmem:[%s3 + $0xf0] sm:$0xff]
    %v386 = vld [vmem:[%s3 + $0xf8] sm:$0xff]
    %v387 = vld [vmem:[%s3 + $0x100] sm:$0xff]
    %v388 = vld [vmem:[%s3 + $0x108] sm:$0xff]
    %v389 = vld [vmem:[%s3 + $0x110] sm:$0xff]
    %v390 = vld [vmem:[%s3 + $0x118] sm:$0xff]
    %v391 = vld [vmem:[%s3 + $0x120] sm:$0xff]
    %v392 = vld [vmem:[%s3 + $0x128] sm:$0xff]
    %v393 = vld [vmem:[%s3 + $0x130] sm:$0xff]
    %v394 = vld [vmem:[%s3 + $0x138] sm:$0xff]
    %v395 = vld [vmem:[%s3 + $0x140] sm:$0xff]
    %v396 = vld [vmem:[%s3 + $0x148] sm:$0xff]
    %v397 = vld [vmem:[%s3 + $0x150] sm:$0xff]
    %v398 = vld [vmem:[%s3 + $0x158] sm:$0xff]
    %v399 = vld [vmem:[%s3 + $0x160] sm:$0xff]
    %v400 = vld [vmem:[%s3 + $0x168] sm:$0xff]
    %v401 = vld [vmem:[%s3 + $0x170] sm:$0xff]
    %v402 = vld [vmem:[%s3 + $0x178] sm:$0xff]
    %v403 = vld [vmem:[%s3 + $0x180] sm:$0xff]
    %v404 = vld [vmem:[%s3 + $0x188] sm:$0xff]
    %v405 = vld [vmem:[%s3 + $0x190] sm:$0xff]
    %v406 = vld [vmem:[%s3 + $0x198] sm:$0xff]
    %v407 = vld [vmem:[%s3 + $0x1a0] sm:$0xff]
    %v408 = vld [vmem:[%s3 + $0x1a8] sm:$0xff]
    %v409 = vld [vmem:[%s3 + $0x1b0] sm:$0xff]
    %v410 = vld [vmem:[%s3 + $0x1b8] sm:$0xff]
    %v411 = vld [vmem:[%s3 + $0x1c0] sm:$0xff]
    %v412 = vld [vmem:[%s3 + $0x1c8] sm:$0xff]
    %v413 = vld [vmem:[%s3 + $0x1d0] sm:$0xff]
    %v414 = vld [vmem:[%s3 + $0x1d8] sm:$0xff]
    %v415 = vld [vmem:[%s3 + $0x1e0] sm:$0xff]
    %v416 = vld [vmem:[%s3 + $0x1e8] sm:$0xff]
    %v417 = vld [vmem:[%s3 + $0x1f0] sm:$0xff]
    %v418 = vld [vmem:[%s3 + $0x1f8] sm:$0xff]
    %v419 = vld [vmem:[%s3 + $0x200] sm:$0xff]
    %v420 = vld [vmem:[%s3 + $0x208] sm:$0xff]
    %v421 = vld [vmem:[%s3 + $0x210] sm:$0xff]
    %v422 = vld [vmem:[%s3 + $0x218] sm:$0xff]
    %v423 = vld [vmem:[%s3 + $0x220] sm:$0xff]
    %v424 = vld [vmem:[%s3 + $0x228] sm:$0xff]
    %v425 = vld [vmem:[%s3 + $0x230] sm:$0xff]
    %v426 = vld [vmem:[%s3 + $0x238] sm:$0xff]
    %v427 = vld [vmem:[%s3 + $0x240] sm:$0xff]
    %v428 = vld [vmem:[%s3 + $0x248] sm:$0xff]
    %v429 = vld [vmem:[%s3 + $0x250] sm:$0xff]
    %v430 = vld [vmem:[%s3 + $0x258] sm:$0xff]
    %v431 = vld [vmem:[%s3 + $0x260] sm:$0xff]
    %v432 = vld [vmem:[%s3 + $0x268] sm:$0xff]
    %v433 = vld [vmem:[%s3 + $0x270] sm:$0xff]
    %v434 = vld [vmem:[%s3 + $0x278] sm:$0xff]
    %v435 = vld [vmem:[%s3 + $0x280] sm:$0xff]
    %v436 = vld [vmem:[%s3 + $0x288] sm:$0xff]
    %v437 = vld [vmem:[%s3 + $0x290] sm:$0xff]
    %v438 = vld [vmem:[%s3 + $0x298] sm:$0xf]
    %vm439 = vcmask 228352
    %v441 = vsel %vm439, %v354, 0
    %vm443 = vcmask 1043456
    %v445 = vsel %vm443, %v438, 0
    %447 = vmatprep.subr.mxu0 0.0
    %448 = vmatpush1.msra.mxu0 %v355
    %449 = vmatprep.subr.mxu0 0.0
    %450 = vmatpush1.msra.mxu0 %v356
    %451 = vmatprep.subr.mxu0 0.0
    %452 = vmatpush1.msra.mxu0 %v357
    %453 = vmatprep.subr.mxu0 0.0
    %454 = vmatpush1.msra.mxu0 %v358
    %455 = vmatprep.subr.mxu0 0.0
    %456 = vmatpush1.msra.mxu0 %v359
    %457 = vmatprep.subr.mxu0 0.0
    %458 = vmatpush1.msra.mxu0 %v360
    %459 = vmatprep.subr.mxu0 0.0
    %460 = vmatpush1.msra.mxu0 %v361
    %461 = vmatprep.subr.mxu0 0.0
    %462 = vmatpush1.msra.mxu0 %v362
    %463 = vmatprep.subr.mxu0 0.0
    %464 = vmatpush1.msra.mxu0 %v363
    %465 = vmatprep.subr.mxu0 0.0
    %466 = vmatpush1.msra.mxu0 %v364
    %467 = vmatprep.subr.mxu0 0.0
    %468 = vmatpush1.msra.mxu0 %v365
    %469 = vmatprep.subr.mxu0 0.0
    %470 = vmatpush1.msra.mxu0 %v366
    %471 = vmatprep.subr.mxu0 0.0
    %472 = vmatpush1.msra.mxu0 %v367
    %473 = vmatprep.subr.mxu0 0.0
    %474 = vmatpush1.msra.mxu0 %v368
    %475 = vmatprep.subr.mxu0 0.0
    %476 = vmatpush1.msra.mxu0 %v369
    %477 = vmatprep.subr.mxu0 0.0
    %478 = vmatpush1.msra.mxu0 %v370
    %479 = vmatprep.subr.mxu0 0.0
    %480 = vmatpush1.msra.mxu0 %v371
    %481 = vmatprep.subr.mxu0 0.0
    %482 = vmatpush1.msra.mxu0 %v372
    %483 = vmatprep.subr.mxu0 0.0
    %484 = vmatpush1.msra.mxu0 %v373
    %485 = vmatprep.subr.mxu0 0.0
    %486 = vmatpush1.msra.mxu0 %v374
    %487 = vmatprep.subr.mxu0 0.0
    %488 = vmatpush1.msra.mxu0 %v375
    %489 = vmatprep.subr.mxu0 0.0
    %490 = vmatpush1.msra.mxu0 %v376
    %491 = vmatprep.subr.mxu0 0.0
    %492 = vmatpush1.msra.mxu0 %v377
    %493 = vmatprep.subr.mxu0 0.0
    %494 = vmatpush1.msra.mxu0 %v378
    %495 = vmatprep.subr.mxu0 0.0
    %496 = vmatpush1.msra.mxu0 %v379
    %497 = vmatprep.subr.mxu0 0.0
    %498 = vmatpush1.msra.mxu0 %v380
    %499 = vmatprep.subr.mxu0 0.0
    %500 = vmatpush1.msra.mxu0 %v381
    %501 = vmatprep.subr.mxu0 0.0
    %502 = vmatpush1.msra.mxu0 %v382
    %503 = vmatprep.subr.mxu0 0.0
    %504 = vmatpush1.msra.mxu0 %v383
    %505 = vmatprep.subr.mxu0 0.0
    %506 = vmatpush1.msra.mxu0 %v384
    %507 = vmatprep.subr.mxu0 0.0
    %508 = vmatpush1.msra.mxu0 %v385
    %509 = vmatprep.subr.mxu0 0.0
    %510 = vmatpush1.msra.mxu0 %v386
    %511 = vmatprep.mubr.f32.mxu0 %v350
    %512 = vmatmul.mubr.f32.gmra.mrb[0].mxu0 %v349
    %v513 = vpop.f32.mrb[0].mxu0
    %v514 = vadd.f32 0.0, %v513
    %v515 = vpop.f32.mrb[0].mxu0
    %516 = vdwg.mxu0
    %517 = vmatprep.subr.mxu0 0.0
    %518 = vmatpush1.msra.mxu0 %v387
    %519 = vmatprep.subr.mxu0 0.0
    %520 = vmatpush1.msra.mxu0 %v388
    %521 = vmatprep.subr.mxu0 0.0
    %522 = vmatpush1.msra.mxu0 %v389
    %523 = vmatprep.subr.mxu0 0.0
    %524 = vmatpush1.msra.mxu0 %v390
    %525 = vmatprep.subr.mxu0 0.0
    %526 = vmatpush1.msra.mxu0 %v391
    %527 = vmatprep.subr.mxu0 0.0
    %528 = vmatpush1.msra.mxu0 %v392
    %529 = vmatprep.subr.mxu0 0.0
    %530 = vmatpush1.msra.mxu0 %v393
    %531 = vmatprep.subr.mxu0 0.0
    %532 = vmatpush1.msra.mxu0 %v394
    %533 = vmatprep.subr.mxu0 0.0
    %534 = vmatpush1.msra.mxu0 %v395
    %535 = vmatprep.subr.mxu0 0.0
    %536 = vmatpush1.msra.mxu0 %v396
    %537 = vmatprep.subr.mxu0 0.0
    %538 = vmatpush1.msra.mxu0 %v397
    %539 = vmatprep.subr.mxu0 0.0
    %540 = vmatpush1.msra.mxu0 %v398
    %541 = vmatprep.subr.mxu0 0.0
    %542 = vmatpush1.msra.mxu0 %v399
    %543 = vmatprep.subr.mxu0 0.0
    %544 = vmatpush1.msra.mxu0 %v400
    %545 = vmatprep.subr.mxu0 0.0
    %546 = vmatpush1.msra.mxu0 %v401
    %547 = vmatprep.subr.mxu0 0.0
    %548 = vmatpush1.msra.mxu0 %v402
    %549 = vmatprep.subr.mxu0 0.0
    %550 = vmatpush1.msra.mxu0 %v403
    %551 = vmatprep.subr.mxu0 0.0
    %552 = vmatpush1.msra.mxu0 %v404
    %553 = vmatprep.subr.mxu0 0.0
    %554 = vmatpush1.msra.mxu0 %v405
    %555 = vmatprep.subr.mxu0 0.0
    %556 = vmatpush1.msra.mxu0 %v406
    %557 = vmatprep.subr.mxu0 0.0
    %558 = vmatpush1.msra.mxu0 %v407
    %559 = vmatprep.subr.mxu0 0.0
    %560 = vmatpush1.msra.mxu0 %v408
    %561 = vmatprep.subr.mxu0 0.0
    %562 = vmatpush1.msra.mxu0 %v409
    %563 = vmatprep.subr.mxu0 0.0
    %564 = vmatpush1.msra.mxu0 %v410
    %565 = vmatprep.subr.mxu0 0.0
    %566 = vmatpush1.msra.mxu0 %v411
    %567 = vmatprep.subr.mxu0 0.0
    %568 = vmatpush1.msra.mxu0 %v412
    %569 = vmatprep.subr.mxu0 0.0
    %570 = vmatpush1.msra.mxu0 %v413
    %571 = vmatprep.subr.mxu0 0.0
    %572 = vmatpush1.msra.mxu0 %v414
    %573 = vmatprep.subr.mxu0 0.0
    %574 = vmatpush1.msra.mxu0 %v415
    %575 = vmatprep.subr.mxu0 0.0
    %576 = vmatpush1.msra.mxu0 %v416
    %577 = vmatprep.subr.mxu0 0.0
    %578 = vmatpush1.msra.mxu0 %v417
    %579 = vmatprep.subr.mxu0 0.0
    %580 = vmatpush1.msra.mxu0 %v418
    %581 = vmatprep.mubr.f32.mxu0 %v352
    %582 = vmatmul.mubr.f32.gmra.mrb[0].mxu0 %v351
    %v583 = vpop.f32.mrb[0].mxu0
    %v584 = vadd.f32 %v514, %v583
    %v585 = vpop.f32.mrb[0].mxu0
    %586 = vdwg.mxu0
    %587 = vmatprep.subr.mxu0 0.0
    %588 = vmatpush1.msra.mxu0 %v419
    %589 = vmatprep.subr.mxu0 0.0
    %590 = vmatpush1.msra.mxu0 %v420
    %591 = vmatprep.subr.mxu0 0.0
    %592 = vmatpush1.msra.mxu0 %v421
    %593 = vmatprep.subr.mxu0 0.0
    %594 = vmatpush1.msra.mxu0 %v422
    %595 = vmatprep.subr.mxu0 0.0
    %596 = vmatpush1.msra.mxu0 %v423
    %597 = vmatprep.subr.mxu0 0.0
    %598 = vmatpush1.msra.mxu0 %v424
    %599 = vmatprep.subr.mxu0 0.0
    %600 = vmatpush1.msra.mxu0 %v425
    %601 = vmatprep.subr.mxu0 0.0
    %602 = vmatpush1.msra.mxu0 %v426
    %603 = vmatprep.subr.mxu0 0.0
    %604 = vmatpush1.msra.mxu0 %v427
    %605 = vmatprep.subr.mxu0 0.0
    %606 = vmatpush1.msra.mxu0 %v428
    %607 = vmatprep.subr.mxu0 0.0
    %608 = vmatpush1.msra.mxu0 %v429
    %609 = vmatprep.subr.mxu0 0.0
    %610 = vmatpush1.msra.mxu0 %v430
    %611 = vmatprep.subr.mxu0 0.0
    %612 = vmatpush1.msra.mxu0 %v431
    %613 = vmatprep.subr.mxu0 0.0
    %614 = vmatpush1.msra.mxu0 %v432
    %615 = vmatprep.subr.mxu0 0.0
    %616 = vmatpush1.msra.mxu0 %v433
    %617 = vmatprep.subr.mxu0 0.0
    %618 = vmatpush1.msra.mxu0 %v434
    %619 = vmatprep.subr.mxu0 0.0
    %620 = vmatpush1.msra.mxu0 %v435
    %621 = vmatprep.subr.mxu0 0.0
    %622 = vmatpush1.msra.mxu0 %v436
    %623 = vmatprep.subr.mxu0 0.0
    %624 = vmatpush1.msra.mxu0 %v437
    %625 = vmatprep.subr.mxu0 0.0
    %626 = vmatpush1.msra.mxu0 %v445
    %627 = vmatprep.subr.mxu0 0.0
    %628 = vmatpush1.msra.mxu0 0.0
    %629 = vmatprep.subr.mxu0 0.0
    %630 = vmatpush1.msra.mxu0 0.0
    %631 = vmatprep.subr.mxu0 0.0
    %632 = vmatpush1.msra.mxu0 0.0
    %633 = vmatprep.subr.mxu0 0.0
    %634 = vmatpush1.msra.mxu0 0.0
    %635 = vmatprep.subr.mxu0 0.0
    %636 = vmatpush1.msra.mxu0 0.0
    %637 = vmatprep.subr.mxu0 0.0
    %638 = vmatpush1.msra.mxu0 0.0
    %639 = vmatprep.subr.mxu0 0.0
    %640 = vmatpush1.msra.mxu0 0.0
    %641 = vmatprep.subr.mxu0 0.0
    %642 = vmatpush1.msra.mxu0 0.0
    %643 = vmatprep.subr.mxu0 0.0
    %644 = vmatpush1.msra.mxu0 0.0
    %645 = vmatprep.subr.mxu0 0.0
    %646 = vmatpush1.msra.mxu0 0.0
    %647 = vmatprep.subr.mxu0 0.0
    %648 = vmatpush1.msra.mxu0 0.0
    %649 = vmatprep.subr.mxu0 0.0
    %650 = vmatpush1.msra.mxu0 0.0
    %651 = vmatprep.mubr.f32.mxu0 %v441
    %652 = vmatmul.mubr.f32.gmra.mrb[0].mxu0 %v353
    %v653 = vpop.f32.mrb[0].mxu0
    %v654 = vadd.f32 %v584, %v653
    %v655 = vpop.f32.mrb[0].mxu0
    %656 = vdwg.mxu0
    %vm657 = vcmask 654336
    %658 = vst.msk [vmem:[#allocation2] sm:$0xff] %vm657, %v654
    %v659 = vld [vmem:[#allocation2] sm:$0x3]
    %v660 = vld [vmem:[%s4] sm:$0xff]
    %v661 = vld [vmem:[%s4 + $0x8] sm:$0xff]
    %v662 = vld [vmem:[%s4 + $0x10] sm:$0xff]
    %v663 = vld [vmem:[%s4 + $0x18] sm:$0xff]
    %v664 = vld [vmem:[%s4 + $0x20] sm:$0xff]
    %v665 = vld [vmem:[%s4 + $0x28] sm:$0xff]
    %v666 = vld [vmem:[%s4 + $0x30] sm:$0xff]
    %v667 = vld [vmem:[%s4 + $0x38] sm:$0xff]
    %v668 = vld [vmem:[%s4 + $0x40] sm:$0xff]
    %v669 = vld [vmem:[%s4 + $0x48] sm:$0xff]
    %v670 = vld [vmem:[%s4 + $0x50] sm:$0xff]
    %v671 = vld [vmem:[%s4 + $0x58] sm:$0xff]
    %v672 = vld [vmem:[%s4 + $0x60] sm:$0xff]
    %v673 = vld [vmem:[%s4 + $0x68] sm:$0xff]
    %v674 = vld [vmem:[%s4 + $0x70] sm:$0xff]
    %v675 = vld [vmem:[%s4 + $0x78] sm:$0xff]
    %v676 = vld [vmem:[%s4 + $0x80] sm:$0xff]
    %v677 = vld [vmem:[%s4 + $0x88] sm:$0xff]
    %v678 = vld [vmem:[%s4 + $0x90] sm:$0xff]
    %v679 = vld [vmem:[%s4 + $0x98] sm:$0xff]
    %v680 = vld [vmem:[#allocation2 + $0x2] sm:$0x3]
    %s681 = scalar_lea.vmem %s4, 160
    %v682 = vld [vmem:[%s681] sm:$0xff]
    %v683 = vld [vmem:[%s681 + $0x8] sm:$0xff]
    %v684 = vld [vmem:[%s681 + $0x10] sm:$0xff]
    %v685 = vld [vmem:[%s681 + $0x18] sm:$0xff]
    %v686 = vld [vmem:[%s681 + $0x20] sm:$0xff]
    %v687 = vld [vmem:[%s681 + $0x28] sm:$0xff]
    %v688 = vld [vmem:[%s681 + $0x30] sm:$0xff]
    %v689 = vld [vmem:[%s681 + $0x38] sm:$0xff]
    %v690 = vld [vmem:[%s681 + $0x40] sm:$0xff]
    %v691 = vld [vmem:[%s681 + $0x48] sm:$0xff]
    %v692 = vld [vmem:[%s681 + $0x50] sm:$0xff]
    %v693 = vld [vmem:[%s681 + $0x58] sm:$0xff]
    %v694 = vld [vmem:[%s681 + $0x60] sm:$0xff]
    %v695 = vld [vmem:[%s681 + $0x68] sm:$0xff]
    %v696 = vld [vmem:[%s681 + $0x70] sm:$0xff]
    %v697 = vld [vmem:[%s681 + $0x78] sm:$0xff]
    %v698 = vld [vmem:[%s681 + $0x80] sm:$0xff]
    %v699 = vld [vmem:[%s681 + $0x88] sm:$0xff]
    %v700 = vld [vmem:[%s681 + $0x90] sm:$0xff]
    %v701 = vld [vmem:[%s681 + $0x98] sm:$0xff]
    %v703 = vsel %vm657, %v680, 0
    %705 = vmatprep.subr.mxu0 %v683
    %706 = vmatpush1.msra.mxu0 %v682
    %707 = vmatprep.subr.mxu0 %v685
    %708 = vmatpush1.msra.mxu0 %v684
    %709 = vmatprep.subr.mxu0 %v687
    %710 = vmatpush1.msra.mxu0 %v686
    %711 = vmatprep.subr.mxu0 %v689
    %712 = vmatpush1.msra.mxu0 %v688
    %713 = vmatprep.subr.mxu0 %v691
    %714 = vmatpush1.msra.mxu0 %v690
    %715 = vmatprep.subr.mxu0 %v693
    %716 = vmatpush1.msra.mxu0 %v692
    %717 = vmatprep.subr.mxu0 %v695
    %718 = vmatpush1.msra.mxu0 %v694
    %719 = vmatprep.subr.mxu0 %v697
    %720 = vmatpush1.msra.mxu0 %v696
    %721 = vmatprep.subr.mxu0 %v699
    %722 = vmatpush1.msra.mxu0 %v698
    %723 = vmatprep.subr.mxu0 %v701
    %724 = vmatpush1.msra.mxu0 %v700
    %725 = vmatprep.subr.mxu0 0.0
    %726 = vmatpush1.msra.mxu0 0.0
    %727 = vmatprep.subr.mxu0 0.0
    %728 = vmatpush1.msra.mxu0 0.0
    %729 = vmatprep.subr.mxu0 0.0
    %730 = vmatpush1.msra.mxu0 0.0
    %731 = vmatprep.subr.mxu0 0.0
    %732 = vmatpush1.msra.mxu0 0.0
    %733 = vmatprep.subr.mxu0 0.0
    %734 = vmatpush1.msra.mxu0 0.0
    %735 = vmatprep.subr.mxu0 0.0
    %736 = vmatpush1.msra.mxu0 0.0
    %737 = vmatprep.subr.mxu0 0.0
    %738 = vmatpush1.msra.mxu0 0.0
    %739 = vmatprep.subr.mxu0 0.0
    %740 = vmatpush1.msra.mxu0 0.0
    %741 = vmatprep.subr.mxu0 0.0
    %742 = vmatpush1.msra.mxu0 0.0
    %743 = vmatprep.subr.mxu0 0.0
    %744 = vmatpush1.msra.mxu0 0.0
    %745 = vmatprep.subr.mxu0 0.0
    %746 = vmatpush1.msra.mxu0 0.0
    %747 = vmatprep.subr.mxu0 0.0
    %748 = vmatpush1.msra.mxu0 0.0
    %749 = vmatprep.subr.mxu0 0.0
    %750 = vmatpush1.msra.mxu0 0.0
    %751 = vmatprep.subr.mxu0 0.0
    %752 = vmatpush1.msra.mxu0 0.0
    %753 = vmatprep.subr.mxu0 0.0
    %754 = vmatpush1.msra.mxu0 0.0
    %755 = vmatprep.subr.mxu0 0.0
    %756 = vmatpush1.msra.mxu0 0.0
    %757 = vmatprep.subr.mxu0 0.0
    %758 = vmatpush1.msra.mxu0 0.0
    %759 = vmatprep.subr.mxu0 0.0
    %760 = vmatpush1.msra.mxu0 0.0
    %761 = vmatprep.subr.mxu0 0.0
    %762 = vmatpush1.msra.mxu0 0.0
    %763 = vmatprep.subr.mxu0 0.0
    %764 = vmatpush1.msra.mxu0 0.0
    %765 = vmatprep.subr.mxu0 0.0
    %766 = vmatpush1.msra.mxu0 0.0
    %767 = vmatprep.subr.mxu0 0.0
    %768 = vmatpush1.msra.mxu0 0.0
    %769 = vmatprep.mubr.f32.mxu0 0.0
    %770 = vmatmul.mubr.f32.gmra.mrb[0].mxu0 %v703
    %v771 = vpop.f32.mrb[0].mxu0
    %v772 = vadd.f32 0.0, %v771
    %v773 = vpop.f32.mrb[0].mxu0
    %v774 = vadd.f32 0.0, %v773
    %775 = vdwg.mxu0
    %v777 = vsel %vm657, %v659, 0
    %779 = vmatprep.subr.mxu0 %v661
    %780 = vmatpush1.msra.mxu0 %v660
    %781 = vmatprep.subr.mxu0 %v663
    %782 = vmatpush1.msra.mxu0 %v662
    %783 = vmatprep.subr.mxu0 %v665
    %784 = vmatpush1.msra.mxu0 %v664
    %785 = vmatprep.subr.mxu0 %v667
    %786 = vmatpush1.msra.mxu0 %v666
    %787 = vmatprep.subr.mxu0 %v669
    %788 = vmatpush1.msra.mxu0 %v668
    %789 = vmatprep.subr.mxu0 %v671
    %790 = vmatpush1.msra.mxu0 %v670
    %791 = vmatprep.subr.mxu0 %v673
    %792 = vmatpush1.msra.mxu0 %v672
    %793 = vmatprep.subr.mxu0 %v675
    %794 = vmatpush1.msra.mxu0 %v674
    %795 = vmatprep.subr.mxu0 %v677
    %796 = vmatpush1.msra.mxu0 %v676
    %797 = vmatprep.subr.mxu0 %v679
    %798 = vmatpush1.msra.mxu0 %v678
    %799 = vmatprep.subr.mxu0 0.0
    %800 = vmatpush1.msra.mxu0 0.0
    %801 = vmatprep.subr.mxu0 0.0
    %802 = vmatpush1.msra.mxu0 0.0
    %803 = vmatprep.subr.mxu0 0.0
    %804 = vmatpush1.msra.mxu0 0.0
    %805 = vmatprep.subr.mxu0 0.0
    %806 = vmatpush1.msra.mxu0 0.0
    %807 = vmatprep.subr.mxu0 0.0
    %808 = vmatpush1.msra.mxu0 0.0
    %809 = vmatprep.subr.mxu0 0.0
    %810 = vmatpush1.msra.mxu0 0.0
    %811 = vmatprep.subr.mxu0 0.0
    %812 = vmatpush1.msra.mxu0 0.0
    %813 = vmatprep.subr.mxu0 0.0
    %814 = vmatpush1.msra.mxu0 0.0
    %815 = vmatprep.subr.mxu0 0.0
    %816 = vmatpush1.msra.mxu0 0.0
    %817 = vmatprep.subr.mxu0 0.0
    %818 = vmatpush1.msra.mxu0 0.0
    %819 = vmatprep.subr.mxu0 0.0
    %820 = vmatpush1.msra.mxu0 0.0
    %821 = vmatprep.subr.mxu0 0.0
    %822 = vmatpush1.msra.mxu0 0.0
    %823 = vmatprep.subr.mxu0 0.0
    %824 = vmatpush1.msra.mxu0 0.0
    %825 = vmatprep.subr.mxu0 0.0
    %826 = vmatpush1.msra.mxu0 0.0
    %827 = vmatprep.subr.mxu0 0.0
    %828 = vmatpush1.msra.mxu0 0.0
    %829 = vmatprep.subr.mxu0 0.0
    %830 = vmatpush1.msra.mxu0 0.0
    %831 = vmatprep.subr.mxu0 0.0
    %832 = vmatpush1.msra.mxu0 0.0
    %833 = vmatprep.subr.mxu0 0.0
    %834 = vmatpush1.msra.mxu0 0.0
    %835 = vmatprep.subr.mxu0 0.0
    %836 = vmatpush1.msra.mxu0 0.0
    %837 = vmatprep.subr.mxu0 0.0
    %838 = vmatpush1.msra.mxu0 0.0
    %839 = vmatprep.subr.mxu0 0.0
    %840 = vmatpush1.msra.mxu0 0.0
    %841 = vmatprep.subr.mxu0 0.0
    %842 = vmatpush1.msra.mxu0 0.0
    %843 = vmatprep.mubr.f32.mxu0 0.0
    %844 = vmatmul.mubr.f32.gmra.mrb[0].mxu0 %v777
    %v845 = vpop.f32.mrb[0].mxu0
    %v846 = vadd.f32 %v772, %v845
    %v847 = vpop.f32.mrb[0].mxu0
    %v848 = vadd.f32 %v774, %v847
    %849 = vdwg.mxu0
    %v850 = vld [vmem:[#allocation2 + $0x4] sm:$0x3]
    %s851 = scalar_lea.vmem %s4, 320
    %v852 = vld [vmem:[%s851] sm:$0xff]
    %v853 = vld [vmem:[%s851 + $0x8] sm:$0xff]
    %v854 = vld [vmem:[%s851 + $0x10] sm:$0xff]
    %v855 = vld [vmem:[%s851 + $0x18] sm:$0xff]
    %v856 = vld [vmem:[%s851 + $0x20] sm:$0xff]
    %v857 = vld [vmem:[%s851 + $0x28] sm:$0xff]
    %v858 = vld [vmem:[%s851 + $0x30] sm:$0xff]
    %v859 = vld [vmem:[%s851 + $0x38] sm:$0xff]
    %v860 = vld [vmem:[%s851 + $0x40] sm:$0xff]
    %v861 = vld [vmem:[%s851 + $0x48] sm:$0xff]
    %v862 = vld [vmem:[%s851 + $0x50] sm:$0xff]
    %v863 = vld [vmem:[%s851 + $0x58] sm:$0xff]
    %v864 = vld [vmem:[%s851 + $0x60] sm:$0xff]
    %v865 = vld [vmem:[%s851 + $0x68] sm:$0xff]
    %v866 = vld [vmem:[%s851 + $0x70] sm:$0xff]
    %v867 = vld [vmem:[%s851 + $0x78] sm:$0xff]
    %v868 = vld [vmem:[%s851 + $0x80] sm:$0xff]
    %v869 = vld [vmem:[%s851 + $0x88] sm:$0xff]
    %v870 = vld [vmem:[%s851 + $0x90] sm:$0xff]
    %v871 = vld [vmem:[%s851 + $0x98] sm:$0xff]
    %v873 = vsel %vm657, %v850, 0
    %875 = vmatprep.subr.mxu0 %v853
    %876 = vmatpush1.msra.mxu0 %v852
    %877 = vmatprep.subr.mxu0 %v855
    %878 = vmatpush1.msra.mxu0 %v854
    %879 = vmatprep.subr.mxu0 %v857
    %880 = vmatpush1.msra.mxu0 %v856
    %881 = vmatprep.subr.mxu0 %v859
    %882 = vmatpush1.msra.mxu0 %v858
    %883 = vmatprep.subr.mxu0 %v861
    %884 = vmatpush1.msra.mxu0 %v860
    %885 = vmatprep.subr.mxu0 %v863
    %886 = vmatpush1.msra.mxu0 %v862
    %887 = vmatprep.subr.mxu0 %v865
    %888 = vmatpush1.msra.mxu0 %v864
    %889 = vmatprep.subr.mxu0 %v867
    %890 = vmatpush1.msra.mxu0 %v866
    %891 = vmatprep.subr.mxu0 %v869
    %892 = vmatpush1.msra.mxu0 %v868
    %893 = vmatprep.subr.mxu0 %v871
    %894 = vmatpush1.msra.mxu0 %v870
    %895 = vmatprep.subr.mxu0 0.0
    %896 = vmatpush1.msra.mxu0 0.0
    %897 = vmatprep.subr.mxu0 0.0
    %898 = vmatpush1.msra.mxu0 0.0
    %899 = vmatprep.subr.mxu0 0.0
    %900 = vmatpush1.msra.mxu0 0.0
    %901 = vmatprep.subr.mxu0 0.0
    %902 = vmatpush1.msra.mxu0 0.0
    %903 = vmatprep.subr.mxu0 0.0
    %904 = vmatpush1.msra.mxu0 0.0
    %905 = vmatprep.subr.mxu0 0.0
    %906 = vmatpush1.msra.mxu0 0.0
    %907 = vmatprep.subr.mxu0 0.0
    %908 = vmatpush1.msra.mxu0 0.0
    %909 = vmatprep.subr.mxu0 0.0
    %910 = vmatpush1.msra.mxu0 0.0
    %911 = vmatprep.subr.mxu0 0.0
    %912 = vmatpush1.msra.mxu0 0.0
    %913 = vmatprep.subr.mxu0 0.0
    %914 = vmatpush1.msra.mxu0 0.0
    %915 = vmatprep.subr.mxu0 0.0
    %916 = vmatpush1.msra.mxu0 0.0
    %917 = vmatprep.subr.mxu0 0.0
    %918 = vmatpush1.msra.mxu0 0.0
    %919 = vmatprep.subr.mxu0 0.0
    %920 = vmatpush1.msra.mxu0 0.0
    %921 = vmatprep.subr.mxu0 0.0
    %922 = vmatpush1.msra.mxu0 0.0
    %923 = vmatprep.subr.mxu0 0.0
    %924 = vmatpush1.msra.mxu0 0.0
    %925 = vmatprep.subr.mxu0 0.0
    %926 = vmatpush1.msra.mxu0 0.0
    %927 = vmatprep.subr.mxu0 0.0
    %928 = vmatpush1.msra.mxu0 0.0
    %929 = vmatprep.subr.mxu0 0.0
    %930 = vmatpush1.msra.mxu0 0.0
    %931 = vmatprep.subr.mxu0 0.0
    %932 = vmatpush1.msra.mxu0 0.0
    %933 = vmatprep.subr.mxu0 0.0
    %934 = vmatpush1.msra.mxu0 0.0
    %935 = vmatprep.subr.mxu0 0.0
    %936 = vmatpush1.msra.mxu0 0.0
    %937 = vmatprep.subr.mxu0 0.0
    %938 = vmatpush1.msra.mxu0 0.0
    %939 = vmatprep.mubr.f32.mxu0 0.0
    %940 = vmatmul.mubr.f32.gmra.mrb[0].mxu0 %v873
    %v941 = vpop.f32.mrb[0].mxu0
    %v942 = vadd.f32 0.0, %v941
    %v943 = vpop.f32.mrb[0].mxu0
    %v944 = vadd.f32 0.0, %v943
    %945 = vdwg.mxu0
    %v946 = vadd.f32 %v846, %v942
    %v947 = vadd.f32 %v848, %v944
    %v948 = vld [vmem:[#allocation2 + $0x6] sm:$0x3]
    %s949 = scalar_lea.vmem %s4, 480
    %v950 = vld [vmem:[%s949] sm:$0xff]
    %v951 = vld [vmem:[%s949 + $0x8] sm:$0xff]
    %v952 = vld [vmem:[%s949 + $0x10] sm:$0xff]
    %v953 = vld [vmem:[%s949 + $0x18] sm:$0xff]
    %v954 = vld [vmem:[%s949 + $0x20] sm:$0xff]
    %v955 = vld [vmem:[%s949 + $0x28] sm:$0xff]
    %v956 = vld [vmem:[%s949 + $0x30] sm:$0xff]
    %v957 = vld [vmem:[%s949 + $0x38] sm:$0xff]
    %v958 = vld [vmem:[%s949 + $0x40] sm:$0xff]
    %v959 = vld [vmem:[%s949 + $0x48] sm:$0xff]
    %v960 = vld [vmem:[%s949 + $0x50] sm:$0xff]
    %v961 = vld [vmem:[%s949 + $0x58] sm:$0xff]
    %v962 = vld [vmem:[%s949 + $0x60] sm:$0xff]
    %v963 = vld [vmem:[%s949 + $0x68] sm:$0xff]
    %v964 = vld [vmem:[%s949 + $0x70] sm:$0xff]
    %v965 = vld [vmem:[%s949 + $0x78] sm:$0xff]
    %v966 = vld [vmem:[%s949 + $0x80] sm:$0xff]
    %v967 = vld [vmem:[%s949 + $0x88] sm:$0xff]
    %v968 = vld [vmem:[%s949 + $0x90] sm:$0xff]
    %v969 = vld [vmem:[%s949 + $0x98] sm:$0xff]
    %v971 = vsel %vm657, %v948, 0
    %973 = vmatprep.subr.mxu0 %v951
    %974 = vmatpush1.msra.mxu0 %v950
    %975 = vmatprep.subr.mxu0 %v953
    %976 = vmatpush1.msra.mxu0 %v952
    %977 = vmatprep.subr.mxu0 %v955
    %978 = vmatpush1.msra.mxu0 %v954
    %979 = vmatprep.subr.mxu0 %v957
    %980 = vmatpush1.msra.mxu0 %v956
    %981 = vmatprep.subr.mxu0 %v959
    %982 = vmatpush1.msra.mxu0 %v958
    %983 = vmatprep.subr.mxu0 %v961
    %984 = vmatpush1.msra.mxu0 %v960
    %985 = vmatprep.subr.mxu0 %v963
    %986 = vmatpush1.msra.mxu0 %v962
    %987 = vmatprep.subr.mxu0 %v965
    %988 = vmatpush1.msra.mxu0 %v964
    %989 = vmatprep.subr.mxu0 %v967
    %990 = vmatpush1.msra.mxu0 %v966
    %991 = vmatprep.subr.mxu0 %v969
    %992 = vmatpush1.msra.mxu0 %v968
    %993 = vmatprep.subr.mxu0 0.0
    %994 = vmatpush1.msra.mxu0 0.0
    %995 = vmatprep.subr.mxu0 0.0
    %996 = vmatpush1.msra.mxu0 0.0
    %997 = vmatprep.subr.mxu0 0.0
    %998 = vmatpush1.msra.mxu0 0.0
    %999 = vmatprep.subr.mxu0 0.0
    %1000 = vmatpush1.msra.mxu0 0.0
    %1001 = vmatprep.subr.mxu0 0.0
    %1002 = vmatpush1.msra.mxu0 0.0
    %1003 = vmatprep.subr.mxu0 0.0
    %1004 = vmatpush1.msra.mxu0 0.0
    %1005 = vmatprep.subr.mxu0 0.0
    %1006 = vmatpush1.msra.mxu0 0.0
    %1007 = vmatprep.subr.mxu0 0.0
    %1008 = vmatpush1.msra.mxu0 0.0
    %1009 = vmatprep.subr.mxu0 0.0
    %1010 = vmatpush1.msra.mxu0 0.0
    %1011 = vmatprep.subr.mxu0 0.0
    %1012 = vmatpush1.msra.mxu0 0.0
    %1013 = vmatprep.subr.mxu0 0.0
    %1014 = vmatpush1.msra.mxu0 0.0
    %1015 = vmatprep.subr.mxu0 0.0
    %1016 = vmatpush1.msra.mxu0 0.0
    %1017 = vmatprep.subr.mxu0 0.0
    %1018 = vmatpush1.msra.mxu0 0.0
    %1019 = vmatprep.subr.mxu0 0.0
    %1020 = vmatpush1.msra.mxu0 0.0
    %1021 = vmatprep.subr.mxu0 0.0
    %1022 = vmatpush1.msra.mxu0 0.0
    %1023 = vmatprep.subr.mxu0 0.0
    %1024 = vmatpush1.msra.mxu0 0.0
    %1025 = vmatprep.subr.mxu0 0.0
    %1026 = vmatpush1.msra.mxu0 0.0
    %1027 = vmatprep.subr.mxu0 0.0
    %1028 = vmatpush1.msra.mxu0 0.0
    %1029 = vmatprep.subr.mxu0 0.0
    %1030 = vmatpush1.msra.mxu0 0.0
    %1031 = vmatprep.subr.mxu0 0.0
    %1032 = vmatpush1.msra.mxu0 0.0
    %1033 = vmatprep.subr.mxu0 0.0
    %1034 = vmatpush1.msra.mxu0 0.0
    %1035 = vmatprep.subr.mxu0 0.0
    %1036 = vmatpush1.msra.mxu0 0.0
    %1037 = vmatprep.mubr.f32.mxu0 0.0
    %1038 = vmatmul.mubr.f32.gmra.mrb[0].mxu0 %v971
    %v1039 = vpop.f32.mrb[0].mxu0
    %v1040 = vadd.f32 0.0, %v1039
    %v1041 = vpop.f32.mrb[0].mxu0
    %v1042 = vadd.f32 0.0, %v1041
    %1043 = vdwg.mxu0
    %v1044 = vadd.f32 %v946, %v1040
    %v1045 = vadd.f32 %v947, %v1042
    %v1046 = vld [vmem:[%s5] sm:$0x3]
    %v1048 = vlaneseq
    %v1049 = vshrl.u32 %v1048, 7
    %v1050 = vsub.s32 0, %v1049
    %v1051 = vrot.slane %v1046, %v1050
    %v1052 = vlaneseq
    %v1053 = vshrl.u32 %v1052, 7
    %v1054 = vsub.s32 1, %v1053
    %v1055 = vrot.slane %v1046, %v1054
    %v1058 = vadd.f32 %v1044, %v1051
    %v1059 = vadd.f32 %v1045, %v1055
    %vm1060 = vcmp.gt.f32.partialorder %v1058, 0.0
    %vm1061 = vcmp.gt.f32.partialorder %v1059, 0.0
    %v1062 = vmul.f32 %v1058, 0.01
    %v1063 = vmul.f32 %v1059, 0.01
    %v1064 = vsel %vm1060, %v1058, %v1062
    %v1065 = vsel %vm1061, %v1059, %v1063
    %v1066 = vld [vmem:[%s6] sm:$0xff]
    %v1067 = vld [vmem:[%s6 + $0x8] sm:$0xff]
    %v1068 = vld [vmem:[%s6 + $0x10] sm:$0xff]
    %v1069 = vld [vmem:[%s6 + $0x18] sm:$0xff]
    %v1070 = vld [vmem:[%s6 + $0x20] sm:$0xff]
    %v1071 = vld [vmem:[%s6 + $0x28] sm:$0xff]
    %v1072 = vld [vmem:[%s6 + $0x30] sm:$0xff]
    %v1073 = vld [vmem:[%s6 + $0x38] sm:$0xff]
    %v1074 = vld [vmem:[%s6 + $0x40] sm:$0xff]
    %v1075 = vld [vmem:[%s6 + $0x48] sm:$0xff]
    %v1076 = vld [vmem:[%s6 + $0x50] sm:$0xff]
    %v1077 = vld [vmem:[%s6 + $0x58] sm:$0xff]
    %v1078 = vld [vmem:[%s6 + $0x60] sm:$0xff]
    %v1079 = vld [vmem:[%s6 + $0x68] sm:$0xff]
    %v1080 = vld [vmem:[%s6 + $0x70] sm:$0xff]
    %v1081 = vld [vmem:[%s6 + $0x78] sm:$0xff]
    %v1082 = vld [vmem:[%s6 + $0x80] sm:$0xff]
    %v1083 = vld [vmem:[%s6 + $0x88] sm:$0xff]
    %v1084 = vld [vmem:[%s6 + $0x90] sm:$0xff]
    %v1085 = vld [vmem:[%s6 + $0x98] sm:$0xff]
    %v1086 = vld [vmem:[%s6 + $0xa0] sm:$0xff]
    %v1087 = vld [vmem:[%s6 + $0xa8] sm:$0xff]
    %v1088 = vld [vmem:[%s6 + $0xb0] sm:$0xff]
    %v1089 = vld [vmem:[%s6 + $0xb8] sm:$0xff]
    %v1090 = vld [vmem:[%s6 + $0xc0] sm:$0xff]
    %v1091 = vld [vmem:[%s6 + $0xc8] sm:$0xff]
    %v1092 = vld [vmem:[%s6 + $0xd0] sm:$0xff]
    %v1093 = vld [vmem:[%s6 + $0xd8] sm:$0xff]
    %v1094 = vld [vmem:[%s6 + $0xe0] sm:$0xff]
    %v1095 = vld [vmem:[%s6 + $0xe8] sm:$0xff]
    %vm1096 = vcmask 916480
    %v1098 = vsel %vm1096, %v1065, 0
    %1100 = vmatprep.subr.mxu0 0.0
    %1101 = vmatpush1.msra.mxu0 %v1066
    %1102 = vmatprep.subr.mxu0 0.0
    %1103 = vmatpush1.msra.mxu0 %v1067
    %1104 = vmatprep.subr.mxu0 0.0
    %1105 = vmatpush1.msra.mxu0 %v1068
    %1106 = vmatprep.subr.mxu0 0.0
    %1107 = vmatpush1.msra.mxu0 %v1069
    %1108 = vmatprep.subr.mxu0 0.0
    %1109 = vmatpush1.msra.mxu0 %v1070
    %1110 = vmatprep.subr.mxu0 0.0
    %1111 = vmatpush1.msra.mxu0 %v1071
    %1112 = vmatprep.subr.mxu0 0.0
    %1113 = vmatpush1.msra.mxu0 %v1072
    %1114 = vmatprep.subr.mxu0 0.0
    %1115 = vmatpush1.msra.mxu0 %v1073
    %1116 = vmatprep.subr.mxu0 0.0
    %1117 = vmatpush1.msra.mxu0 %v1074
    %1118 = vmatprep.subr.mxu0 0.0
    %1119 = vmatpush1.msra.mxu0 %v1075
    %1120 = vmatprep.subr.mxu0 0.0
    %1121 = vmatpush1.msra.mxu0 %v1076
    %1122 = vmatprep.subr.mxu0 0.0
    %1123 = vmatpush1.msra.mxu0 %v1077
    %1124 = vmatprep.subr.mxu0 0.0
    %1125 = vmatpush1.msra.mxu0 %v1078
    %1126 = vmatprep.subr.mxu0 0.0
    %1127 = vmatpush1.msra.mxu0 %v1079
    %1128 = vmatprep.subr.mxu0 0.0
    %1129 = vmatpush1.msra.mxu0 %v1080
    %1130 = vmatprep.subr.mxu0 0.0
    %1131 = vmatpush1.msra.mxu0 %v1081
    %1132 = vmatprep.subr.mxu0 0.0
    %1133 = vmatpush1.msra.mxu0 %v1082
    %1134 = vmatprep.subr.mxu0 0.0
    %1135 = vmatpush1.msra.mxu0 %v1083
    %1136 = vmatprep.subr.mxu0 0.0
    %1137 = vmatpush1.msra.mxu0 %v1084
    %1138 = vmatprep.subr.mxu0 0.0
    %1139 = vmatpush1.msra.mxu0 %v1085
    %1140 = vmatprep.subr.mxu0 0.0
    %1141 = vmatpush1.msra.mxu0 %v1086
    %1142 = vmatprep.subr.mxu0 0.0
    %1143 = vmatpush1.msra.mxu0 %v1087
    %1144 = vmatprep.subr.mxu0 0.0
    %1145 = vmatpush1.msra.mxu0 %v1088
    %1146 = vmatprep.subr.mxu0 0.0
    %1147 = vmatpush1.msra.mxu0 %v1089
    %1148 = vmatprep.subr.mxu0 0.0
    %1149 = vmatpush1.msra.mxu0 %v1090
    %1150 = vmatprep.subr.mxu0 0.0
    %1151 = vmatpush1.msra.mxu0 %v1091
    %1152 = vmatprep.subr.mxu0 0.0
    %1153 = vmatpush1.msra.mxu0 %v1092
    %1154 = vmatprep.subr.mxu0 0.0
    %1155 = vmatpush1.msra.mxu0 %v1093
    %1156 = vmatprep.subr.mxu0 0.0
    %1157 = vmatpush1.msra.mxu0 %v1094
    %1158 = vmatprep.subr.mxu0 0.0
    %1159 = vmatpush1.msra.mxu0 %v1095
    %1160 = vmatprep.subr.mxu0 0.0
    %1161 = vmatpush1.msra.mxu0 0.0
    %1162 = vmatprep.subr.mxu0 0.0
    %1163 = vmatpush1.msra.mxu0 0.0
    %1164 = vmatprep.mubr.f32.mxu0 %v1098
    %1165 = vmatmul.mubr.f32.gmra.mrb[0].mxu0 %v1064
    %v1166 = vpop.f32.mrb[0].mxu0
    %v1167 = vadd.f32 0.0, %v1166
    %v1168 = vpop.f32.mrb[0].mxu0
    %1169 = vdwg.mxu0
    %v1170 = vld [vmem:[%s7] sm:$0xff]
    %v1171 = vld [vmem:[%s7 + $0x8] sm:$0xff]
    %v1172 = vld [vmem:[%s7 + $0x10] sm:$0xff]
    %v1173 = vld [vmem:[%s7 + $0x18] sm:$0xff]
    %v1174 = vld [vmem:[%s7 + $0x20] sm:$0xff]
    %v1175 = vld [vmem:[%s7 + $0x28] sm:$0xff]
    %v1176 = vld [vmem:[%s7 + $0x30] sm:$0xff]
    %v1177 = vld [vmem:[%s7 + $0x38] sm:$0xff]
    %v1178 = vld [vmem:[%s7 + $0x40] sm:$0xff]
    %v1179 = vld [vmem:[%s7 + $0x48] sm:$0xff]
    %v1180 = vld [vmem:[%s7 + $0x50] sm:$0xff]
    %v1181 = vld [vmem:[%s7 + $0x58] sm:$0xff]
    %v1182 = vld [vmem:[%s7 + $0x60] sm:$0xff]
    %v1183 = vld [vmem:[%s7 + $0x68] sm:$0xff]
    %v1184 = vld [vmem:[%s7 + $0x70] sm:$0xff]
    %v1185 = vld [vmem:[%s8] sm:$0x1]
    %v1187 = vlaneseq
    %v1188 = vshrl.u32 %v1187, 7
    %v1189 = vsub.s32 0, %v1188
    %v1190 = vrot.slane %v1185, %v1189
    %vm1192 = vcmask 982016
    %v1194 = vsel %vm1192, %v1167, 0
    %1196 = vmatprep.subr.mxu0 0.0
    %1197 = vmatpush1.msra.mxu0 %v1170
    %1198 = vmatprep.subr.mxu0 0.0
    %1199 = vmatpush1.msra.mxu0 %v1171
    %1200 = vmatprep.subr.mxu0 0.0
    %1201 = vmatpush1.msra.mxu0 %v1172
    %1202 = vmatprep.subr.mxu0 0.0
    %1203 = vmatpush1.msra.mxu0 %v1173
    %1204 = vmatprep.subr.mxu0 0.0
    %1205 = vmatpush1.msra.mxu0 %v1174
    %1206 = vmatprep.subr.mxu0 0.0
    %1207 = vmatpush1.msra.mxu0 %v1175
    %1208 = vmatprep.subr.mxu0 0.0
    %1209 = vmatpush1.msra.mxu0 %v1176
    %1210 = vmatprep.subr.mxu0 0.0
    %1211 = vmatpush1.msra.mxu0 %v1177
    %1212 = vmatprep.subr.mxu0 0.0
    %1213 = vmatpush1.msra.mxu0 %v1178
    %1214 = vmatprep.subr.mxu0 0.0
    %1215 = vmatpush1.msra.mxu0 %v1179
    %1216 = vmatprep.subr.mxu0 0.0
    %1217 = vmatpush1.msra.mxu0 %v1180
    %1218 = vmatprep.subr.mxu0 0.0
    %1219 = vmatpush1.msra.mxu0 %v1181
    %1220 = vmatprep.subr.mxu0 0.0
    %1221 = vmatpush1.msra.mxu0 %v1182
    %1222 = vmatprep.subr.mxu0 0.0
    %1223 = vmatpush1.msra.mxu0 %v1183
    %1224 = vmatprep.subr.mxu0 0.0
    %1225 = vmatpush1.msra.mxu0 %v1184
    %1226 = vmatprep.subr.mxu0 0.0
    %1227 = vmatpush1.msra.mxu0 0.0
    %1228 = vmatprep.subr.mxu0 0.0
    %1229 = vmatpush1.msra.mxu0 0.0
    %1230 = vmatprep.subr.mxu0 0.0
    %1231 = vmatpush1.msra.mxu0 0.0
    %1232 = vmatprep.subr.mxu0 0.0
    %1233 = vmatpush1.msra.mxu0 0.0
    %1234 = vmatprep.subr.mxu0 0.0
    %1235 = vmatpush1.msra.mxu0 0.0
    %1236 = vmatprep.subr.mxu0 0.0
    %1237 = vmatpush1.msra.mxu0 0.0
    %1238 = vmatprep.subr.mxu0 0.0
    %1239 = vmatpush1.msra.mxu0 0.0
    %1240 = vmatprep.subr.mxu0 0.0
    %1241 = vmatpush1.msra.mxu0 0.0
    %1242 = vmatprep.subr.mxu0 0.0
    %1243 = vmatpush1.msra.mxu0 0.0
    %1244 = vmatprep.subr.mxu0 0.0
    %1245 = vmatpush1.msra.mxu0 0.0
    %1246 = vmatprep.subr.mxu0 0.0
    %1247 = vmatpush1.msra.mxu0 0.0
    %1248 = vmatprep.subr.mxu0 0.0
    %1249 = vmatpush1.msra.mxu0 0.0
    %1250 = vmatprep.subr.mxu0 0.0
    %1251 = vmatpush1.msra.mxu0 0.0
    %1252 = vmatprep.subr.mxu0 0.0
    %1253 = vmatpush1.msra.mxu0 0.0
    %1254 = vmatprep.subr.mxu0 0.0
    %1255 = vmatpush1.msra.mxu0 0.0
    %1256 = vmatprep.subr.mxu0 0.0
    %1257 = vmatpush1.msra.mxu0 0.0
    %1258 = vmatprep.subr.mxu0 0.0
    %1259 = vmatpush1.msra.mxu0 0.0
    %1260 = vmatprep.mubr.f32.mxu0 0.0
    %1261 = vmatmul.mubr.f32.gmra.mrb[0].mxu0 %v1194
    %v1262 = vpop.f32.mrb[0].mxu0
    %v1263 = vadd.f32 %v1190, %v1262
    %v1264 = vpop.f32.mrb[0].mxu0
    %1265 = vdwg.mxu0
    %v1266 = vmax.f32 %v1263, 0.0
    %v1267 = vld [vmem:[%s9] sm:$0xff]
    %v1268 = vld [vmem:[%s9 + $0x8] sm:$0xff]
    %v1269 = vld [vmem:[%s9 + $0x10] sm:$0xff]
    %v1270 = vld [vmem:[%s9 + $0x18] sm:$0xff]
    %v1271 = vld [vmem:[%s10] sm:$0x1]
    %v1273 = vlaneseq
    %v1274 = vshrl.u32 %v1273, 7
    %v1275 = vsub.s32 0, %v1274
    %v1276 = vrot.slane %v1271, %v1275
    %vm1278 = vcmask 261120
    %v1280 = vsel %vm1278, %v1266, 0
    %1282 = vmatprep.subr.mxu0 0.0
    %1283 = vmatpush1.msra.mxu0 %v1267
    %1284 = vmatprep.subr.mxu0 0.0
    %1285 = vmatpush1.msra.mxu0 %v1268
    %1286 = vmatprep.subr.mxu0 0.0
    %1287 = vmatpush1.msra.mxu0 %v1269
    %1288 = vmatprep.subr.mxu0 0.0
    %1289 = vmatpush1.msra.mxu0 %v1270
    %1290 = vmatprep.subr.mxu0 0.0
    %1291 = vmatpush1.msra.mxu0 0.0
    %1292 = vmatprep.subr.mxu0 0.0
    %1293 = vmatpush1.msra.mxu0 0.0
    %1294 = vmatprep.subr.mxu0 0.0
    %1295 = vmatpush1.msra.mxu0 0.0
    %1296 = vmatprep.subr.mxu0 0.0
    %1297 = vmatpush1.msra.mxu0 0.0
    %1298 = vmatprep.subr.mxu0 0.0
    %1299 = vmatpush1.msra.mxu0 0.0
    %1300 = vmatprep.subr.mxu0 0.0
    %1301 = vmatpush1.msra.mxu0 0.0
    %1302 = vmatprep.subr.mxu0 0.0
    %1303 = vmatpush1.msra.mxu0 0.0
    %1304 = vmatprep.subr.mxu0 0.0
    %1305 = vmatpush1.msra.mxu0 0.0
    %1306 = vmatprep.subr.mxu0 0.0
    %1307 = vmatpush1.msra.mxu0 0.0
    %1308 = vmatprep.subr.mxu0 0.0
    %1309 = vmatpush1.msra.mxu0 0.0
    %1310 = vmatprep.subr.mxu0 0.0
    %1311 = vmatpush1.msra.mxu0 0.0
    %1312 = vmatprep.subr.mxu0 0.0
    %1313 = vmatpush1.msra.mxu0 0.0
    %1314 = vmatprep.subr.mxu0 0.0
    %1315 = vmatpush1.msra.mxu0 0.0
    %1316 = vmatprep.subr.mxu0 0.0
    %1317 = vmatpush1.msra.mxu0 0.0
    %1318 = vmatprep.subr.mxu0 0.0
    %1319 = vmatpush1.msra.mxu0 0.0
    %1320 = vmatprep.subr.mxu0 0.0
    %1321 = vmatpush1.msra.mxu0 0.0
    %1322 = vmatprep.subr.mxu0 0.0
    %1323 = vmatpush1.msra.mxu0 0.0
    %1324 = vmatprep.subr.mxu0 0.0
    %1325 = vmatpush1.msra.mxu0 0.0
    %1326 = vmatprep.subr.mxu0 0.0
    %1327 = vmatpush1.msra.mxu0 0.0
    %1328 = vmatprep.subr.mxu0 0.0
    %1329 = vmatpush1.msra.mxu0 0.0
    %1330 = vmatprep.subr.mxu0 0.0
    %1331 = vmatpush1.msra.mxu0 0.0
    %1332 = vmatprep.subr.mxu0 0.0
    %1333 = vmatpush1.msra.mxu0 0.0
    %1334 = vmatprep.subr.mxu0 0.0
    %1335 = vmatpush1.msra.mxu0 0.0
    %1336 = vmatprep.subr.mxu0 0.0
    %1337 = vmatpush1.msra.mxu0 0.0
    %1338 = vmatprep.subr.mxu0 0.0
    %1339 = vmatpush1.msra.mxu0 0.0
    %1340 = vmatprep.subr.mxu0 0.0
    %1341 = vmatpush1.msra.mxu0 0.0
    %1342 = vmatprep.subr.mxu0 0.0
    %1343 = vmatpush1.msra.mxu0 0.0
    %1344 = vmatprep.subr.mxu0 0.0
    %1345 = vmatpush1.msra.mxu0 0.0
    %1346 = vmatprep.mubr.f32.mxu0 0.0
    %1347 = vmatmul.mubr.f32.gmra.mrb[0].mxu0 %v1280
    %v1348 = vpop.f32.mrb[0].mxu0
    %v1349 = vadd.f32 %v1276, %v1348
    %v1350 = vpop.f32.mrb[0].mxu0
    %1351 = vdwg.mxu0
    %vm1352 = vcmask 17408
    %1353 = vst.msk [vmem:[#allocation3] sm:$0x3] %vm1352, %v1349
    // Predicated region
    $region46: #{tpu_custom_call.1} parent=1 // pred_check
      _
    $region47: #{tpu_custom_call.1} parent=1 // pred_check_branch
      %1355 = sbr.rel (0) target = $region49
    $region48: #{tpu_custom_call.1} parent=1 // pred_region
      %s1357 = ssub.s32 32, 32
      %1358 = vsyncadd [#allocation4], %s1357
      %s1360 = sshll.u32 [#allocation3], 4
      %s1361 = int_to_ptr.vmem [resolvable:$true] %s1360
      %1363 = dma.vmem_to_hbm [thread:$0]  %s1361, 32, %s11, [#allocation4]
    $region49: #{tpu_custom_call.1} parent=1 // pred_fallthru
      _
    // Predicated region
    $region50: #{tpu_custom_call.1} parent=1 // pred_check
      _
    $region51: #{tpu_custom_call.1} parent=1 // pred_check_branch
      %1365 = sbr.rel (0) target = $region53
    $region52: #{tpu_custom_call.1} parent=1 // pred_region
      %1366 = dma.done [#allocation4], 32
    $region53: #{tpu_custom_call.1} parent=1 // pred_fallthru
      _
    %1367 = vsyncpa [#allocation4], 1

</llo_original>
